<compile_context>
chip_gen: v5e
topology: v5e:2x2
jax: 0.10.0
libtpu: 0.0.40
codegen_flags: <defaults>
</compile_context>

<pallas_src>
import jax
import jax.numpy as jnp
from jax import lax
from jax.experimental import pallas as pl
from jax.experimental.pallas import tpu as pltpu

KP = 8  # padded class count (sublane alignment for the (Kp, S) output)


# ----------------------------------------------------------------------------
# Pallas kernel: fused CAM head (1x1 conv + ReLU for the three used branches)
#   f1_ref : (2, C, TS) bf16   both batch elements of backbone-1 features
#   f2_ref : (1, C, TS) bf16   batch element 1 of backbone-2 features only
#   w_ref  : (KP, C)   bf16    zero-padded classifier weight
#   out_ref: (3, KP, TS) f32   relu(W @ f1[0]), relu(W @ f1[1]), relu(W @ f2[1])
# ----------------------------------------------------------------------------
def cam_head_kernel(f1_ref, f2_ref, w_ref, out_ref):
    w = w_ref[...]                              # (KP, C)

    def head(x):                                # x: (C, TS)
        r = jnp.dot(w, x, preferred_element_type=jnp.float32)
        return jnp.maximum(r, 0.0)              # ReLU on the f32 MXU result

    out_ref[0] = head(f1_ref[0])
    out_ref[1] = head(f1_ref[1])
    out_ref[2] = head(f2_ref[0])


def cam_head(f1_bcs, f2_bcs, w_pad, *, ts=None):
    """f1_bcs/f2_bcs: (2, C, S) bf16, w_pad: (KP, C) bf16 -> (3, KP, S) f32."""
    b, c, s = f1_bcs.shape
    assert b == 2
    kp = w_pad.shape[0]
    if ts is None:
        # TS=512 keeps double-buffered bf16 inputs ~12 MiB (fits the v5e 16 MiB
        # scoped-VMEM default; comfortable on v6e/v7x). TS must be a multiple
        # of 128 or equal to S — 512 satisfies the former, `s` the latter.
        ts = s if s <= 512 else 512
    grid = (pl.cdiv(s, ts),)

    cost = pl.CostEstimate(
        flops=2 * 3 * kp * c * s,
        transcendentals=0,
        bytes_accessed=3 * s * c * 2 + kp * c * 2 + 3 * kp * s * 4)

    return pl.pallas_call(
        cam_head_kernel,
        out_shape=jax.ShapeDtypeStruct((3, kp, s), jnp.float32),
        grid=grid,
        in_specs=[
            pl.BlockSpec((2, c, ts), lambda j: (0, 0, j)),   # f1: both images
            pl.BlockSpec((1, c, ts), lambda j: (1, 0, j)),   # f2: image 1 only
            pl.BlockSpec((kp, c), lambda j: (0, 0)),         # weight, resident
        ],
        out_specs=pl.BlockSpec((3, kp, ts), lambda j: (0, 0, j)),
        compiler_params=pltpu.CompilerParams(
            dimension_semantics=("parallel",)),
        cost_estimate=cost,
    )(f1_bcs, f2_bcs, w_pad)


# ----------------------------------------------------------------------------
# Backbone glue (plain JAX).
# TODO(synk): the pretrained ResNet50 bottleneck stacks (stage1..stage4 /
# stage2_1..stage2_4) are replaced by deterministic stand-in strided convs
# with the same stride/channel signature (strides (4,2,2,1), channels
# 3->256->512->1024->2048); full pretrained weights are not reproducible here.
# ----------------------------------------------------------------------------
def _conv_nchw(x, w, stride):
    return lax.conv_general_dilated(
        x, w, window_strides=(stride, stride), padding="SAME",
        dimension_numbers=("NCHW", "OIHW", "NCHW"))


def make_backbone_params(key, scale=0.05):
    ks = jax.random.split(key, 4)
    shapes = [(256, 3, 3, 3), (512, 256, 3, 3), (1024, 512, 3, 3), (2048, 1024, 3, 3)]
    return [scale * jax.random.normal(k, s, dtype=jnp.float32)
            for k, s in zip(ks, shapes)]


def run_backbone(x, params):
    strides = (4, 2, 2, 1)           # stage1(conv+maxpool)=4, then 2, 2, 1
    for w, s in zip(params, strides):
        x = jax.nn.relu(_conv_nchw(x, w, s))
    return x                         # (B, 2048, H/16, W/16)


# ----------------------------------------------------------------------------
# CAM.forward
# ----------------------------------------------------------------------------
def cam_forward(x, backbone1_params, backbone2_params, classifier_w):
    """x: (2, 3, H, W) f32. Returns (cam1, cam2), each (2, Hf, Wf)."""
    f1 = run_backbone(x, backbone1_params)          # (2, 2048, Hf, Wf)
    f2 = run_backbone(x, backbone2_params)          # (2, 2048, Hf, Wf)

    b, c, hf, wf = f1.shape
    assert b == 2
    s = hf * wf
    k = classifier_w.shape[0]                       # 2 classes

    # NCHW -> (B, C, S): pure reshape, channels stay on the contraction axis.
    # bf16 cast halves HBM reads for the memory-bound head; MXU accum is f32.
    f1_bcs = f1.astype(jnp.bfloat16).reshape(b, c, s)
    f2_bcs = f2.astype(jnp.bfloat16).reshape(b, c, s)

    # classifier weight (K, C, 1, 1) -> (KP, C), zero-padded to KP=8 rows.
    w_kc = classifier_w[:, :, 0, 0].astype(jnp.bfloat16)
    w_pad = jnp.zeros((KP, c), jnp.bfloat16).at[:k, :].set(w_kc)

    r = cam_head(f1_bcs, f2_bcs, w_pad)             # (3, KP, S) f32
    r = r[:, :k, :].reshape(3, k, hf, wf)           # drop pad rows, unflatten S

    # Flip + add on the tiny (K, Hf, Wf) maps (flip commutes with 1x1 conv+ReLU).
    cam1 = r[0] + r[1][:, :, ::-1]                  # x  = x[0] + x[1].flip(-1)
    cam2 = cam1[0:1] + r[2][:, :, ::-1]             # x2 = x[0] + x2[1].flip(-1)
    return cam1, cam2


# ----------------------------------------------------------------------------
# Pure-JAX f32 reference for the CAM head (sanity check).
# ----------------------------------------------------------------------------
def cam_head_ref(f1, f2, classifier_w):
    def conv1x1(f):
        return jnp.einsum("bchw,kc->bkhw", f, classifier_w[:, :, 0, 0])
    c1 = jax.nn.relu(conv1x1(f1))
    cam1 = c1[0] + c1[1][:, :, ::-1]
    c2 = jax.nn.relu(conv1x1(f2))
    cam2 = cam1[0] + c2[1][:, :, ::-1]
    return cam1, cam2


if __name__ == "__main__":
    key = jax.random.PRNGKey(0)
    k_in, k_b1, k_b2, k_cls = jax.random.split(key, 4)

    # CAM expects a 2-image pair (original + horizontally flipped view).
    B, Cin, H, W = 2, 3, 64, 64
    x = jax.random.normal(k_in, (B, Cin, H, W), dtype=jnp.float32)

    backbone1_params = make_backbone_params(k_b1)
    backbone2_params = make_backbone_params(k_b2)
    # nn.Conv2d(2048, 2, 1, bias=False)  ->  weight (2, 2048, 1, 1)
    classifier_w = 0.02 * jax.random.normal(k_cls, (2, 2048, 1, 1), dtype=jnp.float32)

    cam1, cam2 = jax.jit(cam_forward)(x, backbone1_params, backbone2_params,
                                      classifier_w)
    jax.block_until_ready((cam1, cam2))

    # Sanity check against a full-f32 reference of the head; the Pallas path
    # casts features to bf16, so compare with a scale-relative tolerance.
    f1 = run_backbone(x, backbone1_params)
    f2 = run_backbone(x, backbone2_params)
    r1, r2 = cam_head_ref(f1, f2, classifier_w)
    assert cam1.shape == (2, H // 16, W // 16) and cam2.shape == (2, H // 16, W // 16)
    scale1 = float(jnp.maximum(jnp.max(jnp.abs(r1)), 1e-3))
    scale2 = float(jnp.maximum(jnp.max(jnp.abs(r2)), 1e-3))
    assert float(jnp.max(jnp.abs(cam1 - r1))) / scale1 < 2e-2
    assert float(jnp.max(jnp.abs(cam2 - r2))) / scale2 < 2e-2

    print("KERNEL_OK")
</pallas_src>

<mosaic_0001>
module attributes {stable_mosaic.version = 11 : i64} {
  func.func @cam_head_kernel(%arg0: i32, %arg1: memref<2x2048x16xbf16, #tpu.memory_space<vmem>>, %arg2: memref<1x2048x16xbf16, #tpu.memory_space<vmem>>, %arg3: memref<8x2048xbf16, #tpu.memory_space<vmem>>, %arg4: memref<3x8x16xf32, #tpu.memory_space<vmem>>) attributes {dimension_semantics = [#tpu.dimension_semantics<parallel>], iteration_bounds = array<i64: 1>, scalar_prefetch = 0 : i64, scratch_operands = 0 : i64, tpu.core_type = #tpu.core_type<tc>, window_params = [{transform_indices = @transform_0, window_bounds = array<i64: 2, 2048, 16>}, {transform_indices = @transform_1, window_bounds = array<i64: 1, 2048, 16>}, {pipeline_mode = #tpu.pipeline_mode<synchronous>, transform_indices = @transform_2, window_bounds = array<i64: 8, 2048>}, {transform_indices = @transform_3, window_bounds = array<i64: 3, 8, 16>}]} {
    %c0 = arith.constant 0 : index
    %c0_0 = arith.constant 0 : index
    %0 = vector.load %arg3[%c0, %c0_0] : memref<8x2048xbf16, #tpu.memory_space<vmem>>, vector<8x2048xbf16>
    %c0_1 = arith.constant 0 : index
    %c0_2 = arith.constant 0 : index
    %c0_3 = arith.constant 0 : index
    %1 = vector.load %arg1[%c0_1, %c0_2, %c0_3] : memref<2x2048x16xbf16, #tpu.memory_space<vmem>>, vector<1x2048x16xbf16>
    %2 = vector.shape_cast %1 : vector<1x2048x16xbf16> to vector<2048x16xbf16>
    %cst = arith.constant dense<0.000000e+00> : vector<8x16xf32>
    %3 = tpu.matmul %0, %2, %cst {dimension_numbers = #tpu.dot_dimension_numbers<[1], [0], [0], [1], [0, 0, 1, 1], [], []>} : vector<8x2048xbf16>, vector<2048x16xbf16>, vector<8x16xf32> -> vector<8x16xf32>
    %cst_4 = arith.constant 0.000000e+00 : f32
    %4 = vector.broadcast %cst_4 : f32 to vector<8x16xf32>
    %5 = arith.maximumf %3, %4 : vector<8x16xf32>
    %c0_5 = arith.constant 0 : index
    %c0_6 = arith.constant 0 : index
    %c0_7 = arith.constant 0 : index
    %6 = vector.load %arg4[%c0_5, %c0_6, %c0_7] : memref<3x8x16xf32, #tpu.memory_space<vmem>>, vector<1x8x16xf32>
    %7 = vector.shape_cast %6 : vector<1x8x16xf32> to vector<8x16xf32>
    %8 = vector.shape_cast %5 : vector<8x16xf32> to vector<1x8x16xf32>
    tpu.vector_store %arg4[%c0_5, %c0_6, %c0_7], %8 {strides = array<i32>} : memref<3x8x16xf32, #tpu.memory_space<vmem>>, vector<1x8x16xf32>,
    %c1 = arith.constant 1 : index
    %c0_8 = arith.constant 0 : index
    %c0_9 = arith.constant 0 : index
    %9 = vector.load %arg1[%c1, %c0_8, %c0_9] : memref<2x2048x16xbf16, #tpu.memory_space<vmem>>, vector<1x2048x16xbf16>
    %10 = vector.shape_cast %9 : vector<1x2048x16xbf16> to vector<2048x16xbf16>
    %cst_10 = arith.constant dense<0.000000e+00> : vector<8x16xf32>
    %11 = tpu.matmul %0, %10, %cst_10 {dimension_numbers = #tpu.dot_dimension_numbers<[1], [0], [0], [1], [0, 0, 1, 1], [], []>} : vector<8x2048xbf16>, vector<2048x16xbf16>, vector<8x16xf32> -> vector<8x16xf32>
    %cst_11 = arith.constant 0.000000e+00 : f32
    %12 = vector.broadcast %cst_11 : f32 to vector<8x16xf32>
    %13 = arith.maximumf %11, %12 : vector<8x16xf32>
    %c1_12 = arith.constant 1 : index
    %c0_13 = arith.constant 0 : index
    %c0_14 = arith.constant 0 : index
    %14 = vector.load %arg4[%c1_12, %c0_13, %c0_14] : memref<3x8x16xf32, #tpu.memory_space<vmem>>, vector<1x8x16xf32>
    %15 = vector.shape_cast %14 : vector<1x8x16xf32> to vector<8x16xf32>
    %16 = vector.shape_cast %13 : vector<8x16xf32> to vector<1x8x16xf32>
    tpu.vector_store %arg4[%c1_12, %c0_13, %c0_14], %16 {strides = array<i32>} : memref<3x8x16xf32, #tpu.memory_space<vmem>>, vector<1x8x16xf32>,
    %c0_15 = arith.constant 0 : index
    %c0_16 = arith.constant 0 : index
    %c0_17 = arith.constant 0 : index
    %17 = vector.load %arg2[%c0_15, %c0_16, %c0_17] : memref<1x2048x16xbf16, #tpu.memory_space<vmem>>, vector<1x2048x16xbf16>
    %18 = vector.shape_cast %17 : vector<1x2048x16xbf16> to vector<2048x16xbf16>
    %cst_18 = arith.constant dense<0.000000e+00> : vector<8x16xf32>
    %19 = tpu.matmul %0, %18, %cst_18 {dimension_numbers = #tpu.dot_dimension_numbers<[1], [0], [0], [1], [0, 0, 1, 1], [], []>} : vector<8x2048xbf16>, vector<2048x16xbf16>, vector<8x16xf32> -> vector<8x16xf32>
    %cst_19 = arith.constant 0.000000e+00 : f32
    %20 = vector.broadcast %cst_19 : f32 to vector<8x16xf32>
    %21 = arith.maximumf %19, %20 : vector<8x16xf32>
    %c2 = arith.constant 2 : index
    %c0_20 = arith.constant 0 : index
    %c0_21 = arith.constant 0 : index
    %22 = vector.load %arg4[%c2, %c0_20, %c0_21] : memref<3x8x16xf32, #tpu.memory_space<vmem>>, vector<1x8x16xf32>
    %23 = vector.shape_cast %22 : vector<1x8x16xf32> to vector<8x16xf32>
    %24 = vector.shape_cast %21 : vector<8x16xf32> to vector<1x8x16xf32>
    tpu.vector_store %arg4[%c2, %c0_20, %c0_21], %24 {strides = array<i32>} : memref<3x8x16xf32, #tpu.memory_space<vmem>>, vector<1x8x16xf32>,
    return
  }
  func.func @transform_0(%arg0: i32) -> (i32, i32, i32) {
    %c0_i32 = arith.constant 0 : i32
    %c0_i32_0 = arith.constant 0 : i32
    %c0_i32_1 = arith.constant 0 : i32
    return %c0_i32, %c0_i32_0, %arg0 : i32, i32, i32
  }
  func.func @transform_1(%arg0: i32) -> (i32, i32, i32) {
    %c1_i32 = arith.constant 1 : i32
    %c0_i32 = arith.constant 0 : i32
    %c0_i32_0 = arith.constant 0 : i32
    return %c1_i32, %c0_i32, %arg0 : i32, i32, i32
  }
  func.func @transform_2(%arg0: i32) -> (i32, i32) {
    %c0_i32 = arith.constant 0 : i32
    %c0_i32_0 = arith.constant 0 : i32
    %c0_i32_1 = arith.constant 0 : i32
    return %c0_i32, %c0_i32_0 : i32, i32
  }
  func.func @transform_3(%arg0: i32) -> (i32, i32, i32) {
    %c0_i32 = arith.constant 0 : i32
    %c0_i32_0 = arith.constant 0 : i32
    %c0_i32_1 = arith.constant 0 : i32
    return %c0_i32, %c0_i32_0, %arg0 : i32, i32, i32
  }
}

</mosaic_0001>

<llo_original>
// kernel: cam_forward.1
$region0: #{cam_forward.1}
  #allocation0 [shape = 'u32[]', space=smem, size = 0x4, offset = 0x4, fixed_abs, tag = 'smem constant byte address 0x4 - core index']
  #allocation1 [shape = 'u32[72,128]{1,0:T(1,128)}', space=vmem, size = 0x9000, scoped, tag = 'internal scratch']
  %s0 = inlined_call_operand.vmem [shape: bf16[2,2048,16], index: 0, kind: input, shape index: {}]
  %s1 = inlined_call_operand.vmem [shape: bf16[2,2048,16], index: 1, kind: input, shape index: {}]
  %s2 = inlined_call_operand.vmem [shape: bf16[8,2048], index: 2, kind: input, shape index: {}]
  %s3 = inlined_call_operand.vmem [shape: f32[3,8,16], index: 3, kind: output, shape index: {}]
  %s4 = sld [smem:[#allocation0]]
  $region22: #{cam_forward.1} parent=0
    _
  %s6 = ssub.s32 1, %s4
  %s7 = scalar_select 0, %s6, %s4
  // Predicated region
  $region2: #{cam_forward.1} parent=0 // pred_check
    _
  $region3: #{cam_forward.1} parent=0 // pred_check_branch
    %9 = sbr.rel (0) target = $region5
  $region4: #{cam_forward.1} parent=0 // pred_region
    _
  $region5: #{cam_forward.1} parent=0 // pred_fallthru
    _
  // Predicated region
  $region6: #{cam_forward.1} parent=0 // pred_check
    _
  $region7: #{cam_forward.1} parent=0 // pred_check_branch
    %11 = sbr.rel (0) target = $region9
  $region8: #{cam_forward.1} parent=0 // pred_region
    %s12 = scalar_lea.vmem %s1, 1024
  $region9: #{cam_forward.1} parent=0 // pred_fallthru
    _
  // Predicated region
  $region10: #{cam_forward.1} parent=0 // pred_check
    _
  $region11: #{cam_forward.1} parent=0 // pred_check_branch
    %14 = sbr.rel (0) target = $region13
  $region12: #{cam_forward.1} parent=0 // pred_region
    _
  $region13: #{cam_forward.1} parent=0 // pred_fallthru
    _
  %s15 = scalar_lea.vmem %s1, 1024
  %s16 = scalar_lea.vmem %s1, 1024
  %v17 = vld [vmem:[%s2] sm:$0xff]
  %v18 = vld [vmem:[%s2 + $0x8] sm:$0xff]
  %v19 = vld [vmem:[%s2 + $0x10] sm:$0xff]
  %v20 = vld [vmem:[%s2 + $0x18] sm:$0xff]
  %v21 = vld [vmem:[%s2 + $0x20] sm:$0xff]
  %v22 = vld [vmem:[%s2 + $0x28] sm:$0xff]
  %v23 = vld [vmem:[%s2 + $0x30] sm:$0xff]
  %v24 = vld [vmem:[%s2 + $0x38] sm:$0xff]
  %v25 = vld [vmem:[%s0] sm:$0xf]
  %v26 = vld [vmem:[%s0 + $0x4] sm:$0xf]
  %v27 = vld [vmem:[%s0 + $0x8] sm:$0xf]
  %v28 = vld [vmem:[%s0 + $0xc] sm:$0xf]
  %v29 = vld [vmem:[%s0 + $0x10] sm:$0xf]
  %v30 = vld [vmem:[%s0 + $0x14] sm:$0xf]
  %v31 = vld [vmem:[%s0 + $0x18] sm:$0xf]
  %v32 = vld [vmem:[%s0 + $0x1c] sm:$0xf]
  %v33 = vld [vmem:[%s0 + $0x20] sm:$0xf]
  %v34 = vld [vmem:[%s0 + $0x24] sm:$0xf]
  %v35 = vld [vmem:[%s0 + $0x28] sm:$0xf]
  %v36 = vld [vmem:[%s0 + $0x2c] sm:$0xf]
  %v37 = vld [vmem:[%s0 + $0x30] sm:$0xf]
  %v38 = vld [vmem:[%s0 + $0x34] sm:$0xf]
  %v39 = vld [vmem:[%s0 + $0x38] sm:$0xf]
  %v40 = vld [vmem:[%s0 + $0x3c] sm:$0xf]
  %v41 = vld [vmem:[%s0 + $0x40] sm:$0xf]
  %v42 = vld [vmem:[%s0 + $0x44] sm:$0xf]
  %v43 = vld [vmem:[%s0 + $0x48] sm:$0xf]
  %v44 = vld [vmem:[%s0 + $0x4c] sm:$0xf]
  %v45 = vld [vmem:[%s0 + $0x50] sm:$0xf]
  %v46 = vld [vmem:[%s0 + $0x54] sm:$0xf]
  %v47 = vld [vmem:[%s0 + $0x58] sm:$0xf]
  %v48 = vld [vmem:[%s0 + $0x5c] sm:$0xf]
  %v49 = vld [vmem:[%s0 + $0x60] sm:$0xf]
  %v50 = vld [vmem:[%s0 + $0x64] sm:$0xf]
  %v51 = vld [vmem:[%s0 + $0x68] sm:$0xf]
  %v52 = vld [vmem:[%s0 + $0x6c] sm:$0xf]
  %v53 = vld [vmem:[%s0 + $0x70] sm:$0xf]
  %v54 = vld [vmem:[%s0 + $0x74] sm:$0xf]
  %v55 = vld [vmem:[%s0 + $0x78] sm:$0xf]
  %v56 = vld [vmem:[%s0 + $0x7c] sm:$0xf]
  %v57 = vld [vmem:[%s0 + $0x80] sm:$0xf]
  %v58 = vld [vmem:[%s0 + $0x84] sm:$0xf]
  %v59 = vld [vmem:[%s0 + $0x88] sm:$0xf]
  %v60 = vld [vmem:[%s0 + $0x8c] sm:$0xf]
  %v61 = vld [vmem:[%s0 + $0x90] sm:$0xf]
  %v62 = vld [vmem:[%s0 + $0x94] sm:$0xf]
  %v63 = vld [vmem:[%s0 + $0x98] sm:$0xf]
  %v64 = vld [vmem:[%s0 + $0x9c] sm:$0xf]
  %v65 = vld [vmem:[%s0 + $0xa0] sm:$0xf]
  %v66 = vld [vmem:[%s0 + $0xa4] sm:$0xf]
  %v67 = vld [vmem:[%s0 + $0xa8] sm:$0xf]
  %v68 = vld [vmem:[%s0 + $0xac] sm:$0xf]
  %v69 = vld [vmem:[%s0 + $0xb0] sm:$0xf]
  %v70 = vld [vmem:[%s0 + $0xb4] sm:$0xf]
  %v71 = vld [vmem:[%s0 + $0xb8] sm:$0xf]
  %v72 = vld [vmem:[%s0 + $0xbc] sm:$0xf]
  %v73 = vld [vmem:[%s0 + $0xc0] sm:$0xf]
  %v74 = vld [vmem:[%s0 + $0xc4] sm:$0xf]
  %v75 = vld [vmem:[%s0 + $0xc8] sm:$0xf]
  %v76 = vld [vmem:[%s0 + $0xcc] sm:$0xf]
  %v77 = vld [vmem:[%s0 + $0xd0] sm:$0xf]
  %v78 = vld [vmem:[%s0 + $0xd4] sm:$0xf]
  %v79 = vld [vmem:[%s0 + $0xd8] sm:$0xf]
  %v80 = vld [vmem:[%s0 + $0xdc] sm:$0xf]
  %v81 = vld [vmem:[%s0 + $0xe0] sm:$0xf]
  %v82 = vld [vmem:[%s0 + $0xe4] sm:$0xf]
  %v83 = vld [vmem:[%s0 + $0xe8] sm:$0xf]
  %v84 = vld [vmem:[%s0 + $0xec] sm:$0xf]
  %v85 = vld [vmem:[%s0 + $0xf0] sm:$0xf]
  %v86 = vld [vmem:[%s0 + $0xf4] sm:$0xf]
  %v87 = vld [vmem:[%s0 + $0xf8] sm:$0xf]
  %v88 = vld [vmem:[%s0 + $0xfc] sm:$0xf]
  %v89 = vld [vmem:[%s0 + $0x100] sm:$0xf]
  %v90 = vld [vmem:[%s0 + $0x104] sm:$0xf]
  %v91 = vld [vmem:[%s0 + $0x108] sm:$0xf]
  %v92 = vld [vmem:[%s0 + $0x10c] sm:$0xf]
  %v93 = vld [vmem:[%s0 + $0x110] sm:$0xf]
  %v94 = vld [vmem:[%s0 + $0x114] sm:$0xf]
  %v95 = vld [vmem:[%s0 + $0x118] sm:$0xf]
  %v96 = vld [vmem:[%s0 + $0x11c] sm:$0xf]
  %v97 = vld [vmem:[%s0 + $0x120] sm:$0xf]
  %v98 = vld [vmem:[%s0 + $0x124] sm:$0xf]
  %v99 = vld [vmem:[%s0 + $0x128] sm:$0xf]
  %v100 = vld [vmem:[%s0 + $0x12c] sm:$0xf]
  %v101 = vld [vmem:[%s0 + $0x130] sm:$0xf]
  %v102 = vld [vmem:[%s0 + $0x134] sm:$0xf]
  %v103 = vld [vmem:[%s0 + $0x138] sm:$0xf]
  %v104 = vld [vmem:[%s0 + $0x13c] sm:$0xf]
  %v105 = vld [vmem:[%s0 + $0x140] sm:$0xf]
  %v106 = vld [vmem:[%s0 + $0x144] sm:$0xf]
  %v107 = vld [vmem:[%s0 + $0x148] sm:$0xf]
  %v108 = vld [vmem:[%s0 + $0x14c] sm:$0xf]
  %v109 = vld [vmem:[%s0 + $0x150] sm:$0xf]
  %v110 = vld [vmem:[%s0 + $0x154] sm:$0xf]
  %v111 = vld [vmem:[%s0 + $0x158] sm:$0xf]
  %v112 = vld [vmem:[%s0 + $0x15c] sm:$0xf]
  %v113 = vld [vmem:[%s0 + $0x160] sm:$0xf]
  %v114 = vld [vmem:[%s0 + $0x164] sm:$0xf]
  %v115 = vld [vmem:[%s0 + $0x168] sm:$0xf]
  %v116 = vld [vmem:[%s0 + $0x16c] sm:$0xf]
  %v117 = vld [vmem:[%s0 + $0x170] sm:$0xf]
  %v118 = vld [vmem:[%s0 + $0x174] sm:$0xf]
  %v119 = vld [vmem:[%s0 + $0x178] sm:$0xf]
  %v120 = vld [vmem:[%s0 + $0x17c] sm:$0xf]
  %v121 = vld [vmem:[%s0 + $0x180] sm:$0xf]
  %v122 = vld [vmem:[%s0 + $0x184] sm:$0xf]
  %v123 = vld [vmem:[%s0 + $0x188] sm:$0xf]
  %v124 = vld [vmem:[%s0 + $0x18c] sm:$0xf]
  %v125 = vld [vmem:[%s0 + $0x190] sm:$0xf]
  %v126 = vld [vmem:[%s0 + $0x194] sm:$0xf]
  %v127 = vld [vmem:[%s0 + $0x198] sm:$0xf]
  %v128 = vld [vmem:[%s0 + $0x19c] sm:$0xf]
  %v129 = vld [vmem:[%s0 + $0x1a0] sm:$0xf]
  %v130 = vld [vmem:[%s0 + $0x1a4] sm:$0xf]
  %v131 = vld [vmem:[%s0 + $0x1a8] sm:$0xf]
  %v132 = vld [vmem:[%s0 + $0x1ac] sm:$0xf]
  %v133 = vld [vmem:[%s0 + $0x1b0] sm:$0xf]
  %v134 = vld [vmem:[%s0 + $0x1b4] sm:$0xf]
  %v135 = vld [vmem:[%s0 + $0x1b8] sm:$0xf]
  %v136 = vld [vmem:[%s0 + $0x1bc] sm:$0xf]
  %v137 = vld [vmem:[%s0 + $0x1c0] sm:$0xf]
  %v138 = vld [vmem:[%s0 + $0x1c4] sm:$0xf]
  %v139 = vld [vmem:[%s0 + $0x1c8] sm:$0xf]
  %v140 = vld [vmem:[%s0 + $0x1cc] sm:$0xf]
  %v141 = vld [vmem:[%s0 + $0x1d0] sm:$0xf]
  %v142 = vld [vmem:[%s0 + $0x1d4] sm:$0xf]
  %v143 = vld [vmem:[%s0 + $0x1d8] sm:$0xf]
  %v144 = vld [vmem:[%s0 + $0x1dc] sm:$0xf]
  %v145 = vld [vmem:[%s0 + $0x1e0] sm:$0xf]
  %v146 = vld [vmem:[%s0 + $0x1e4] sm:$0xf]
  %v147 = vld [vmem:[%s0 + $0x1e8] sm:$0xf]
  %v148 = vld [vmem:[%s0 + $0x1ec] sm:$0xf]
  %v149 = vld [vmem:[%s0 + $0x1f0] sm:$0xf]
  %v150 = vld [vmem:[%s0 + $0x1f4] sm:$0xf]
  %v151 = vld [vmem:[%s0 + $0x1f8] sm:$0xf]
  %v152 = vld [vmem:[%s0 + $0x1fc] sm:$0xf]
  %v153 = vld [vmem:[%s0 + $0x200] sm:$0xf]
  %v154 = vld [vmem:[%s0 + $0x204] sm:$0xf]
  %v155 = vld [vmem:[%s0 + $0x208] sm:$0xf]
  %v156 = vld [vmem:[%s0 + $0x20c] sm:$0xf]
  %v157 = vld [vmem:[%s0 + $0x210] sm:$0xf]
  %v158 = vld [vmem:[%s0 + $0x214] sm:$0xf]
  %v159 = vld [vmem:[%s0 + $0x218] sm:$0xf]
  %v160 = vld [vmem:[%s0 + $0x21c] sm:$0xf]
  %v161 = vld [vmem:[%s0 + $0x220] sm:$0xf]
  %v162 = vld [vmem:[%s0 + $0x224] sm:$0xf]
  %v163 = vld [vmem:[%s0 + $0x228] sm:$0xf]
  %v164 = vld [vmem:[%s0 + $0x22c] sm:$0xf]
  %v165 = vld [vmem:[%s0 + $0x230] sm:$0xf]
  %v166 = vld [vmem:[%s0 + $0x234] sm:$0xf]
  %v167 = vld [vmem:[%s0 + $0x238] sm:$0xf]
  %v168 = vld [vmem:[%s0 + $0x23c] sm:$0xf]
  %v169 = vld [vmem:[%s0 + $0x240] sm:$0xf]
  %v170 = vld [vmem:[%s0 + $0x244] sm:$0xf]
  %v171 = vld [vmem:[%s0 + $0x248] sm:$0xf]
  %v172 = vld [vmem:[%s0 + $0x24c] sm:$0xf]
  %v173 = vld [vmem:[%s0 + $0x250] sm:$0xf]
  %v174 = vld [vmem:[%s0 + $0x254] sm:$0xf]
  %v175 = vld [vmem:[%s0 + $0x258] sm:$0xf]
  %v176 = vld [vmem:[%s0 + $0x25c] sm:$0xf]
  %v177 = vld [vmem:[%s0 + $0x260] sm:$0xf]
  %v178 = vld [vmem:[%s0 + $0x264] sm:$0xf]
  %v179 = vld [vmem:[%s0 + $0x268] sm:$0xf]
  %v180 = vld [vmem:[%s0 + $0x26c] sm:$0xf]
  %v181 = vld [vmem:[%s0 + $0x270] sm:$0xf]
  %v182 = vld [vmem:[%s0 + $0x274] sm:$0xf]
  %v183 = vld [vmem:[%s0 + $0x278] sm:$0xf]
  %v184 = vld [vmem:[%s0 + $0x27c] sm:$0xf]
  %v185 = vld [vmem:[%s0 + $0x280] sm:$0xf]
  %v186 = vld [vmem:[%s0 + $0x284] sm:$0xf]
  %v187 = vld [vmem:[%s0 + $0x288] sm:$0xf]
  %v188 = vld [vmem:[%s0 + $0x28c] sm:$0xf]
  %v189 = vld [vmem:[%s0 + $0x290] sm:$0xf]
  %v190 = vld [vmem:[%s0 + $0x294] sm:$0xf]
  %v191 = vld [vmem:[%s0 + $0x298] sm:$0xf]
  %v192 = vld [vmem:[%s0 + $0x29c] sm:$0xf]
  %v193 = vld [vmem:[%s0 + $0x2a0] sm:$0xf]
  %v194 = vld [vmem:[%s0 + $0x2a4] sm:$0xf]
  %v195 = vld [vmem:[%s0 + $0x2a8] sm:$0xf]
  %v196 = vld [vmem:[%s0 + $0x2ac] sm:$0xf]
  %v197 = vld [vmem:[%s0 + $0x2b0] sm:$0xf]
  %v198 = vld [vmem:[%s0 + $0x2b4] sm:$0xf]
  %v199 = vld [vmem:[%s0 + $0x2b8] sm:$0xf]
  %v200 = vld [vmem:[%s0 + $0x2bc] sm:$0xf]
  %v201 = vld [vmem:[%s0 + $0x2c0] sm:$0xf]
  %v202 = vld [vmem:[%s0 + $0x2c4] sm:$0xf]
  %v203 = vld [vmem:[%s0 + $0x2c8] sm:$0xf]
  %v204 = vld [vmem:[%s0 + $0x2cc] sm:$0xf]
  %v205 = vld [vmem:[%s0 + $0x2d0] sm:$0xf]
  %v206 = vld [vmem:[%s0 + $0x2d4] sm:$0xf]
  %v207 = vld [vmem:[%s0 + $0x2d8] sm:$0xf]
  %v208 = vld [vmem:[%s0 + $0x2dc] sm:$0xf]
  %v209 = vld [vmem:[%s0 + $0x2e0] sm:$0xf]
  %v210 = vld [vmem:[%s0 + $0x2e4] sm:$0xf]
  %v211 = vld [vmem:[%s0 + $0x2e8] sm:$0xf]
  %v212 = vld [vmem:[%s0 + $0x2ec] sm:$0xf]
  %v213 = vld [vmem:[%s0 + $0x2f0] sm:$0xf]
  %v214 = vld [vmem:[%s0 + $0x2f4] sm:$0xf]
  %v215 = vld [vmem:[%s0 + $0x2f8] sm:$0xf]
  %v216 = vld [vmem:[%s0 + $0x2fc] sm:$0xf]
  %v217 = vld [vmem:[%s0 + $0x300] sm:$0xf]
  %v218 = vld [vmem:[%s0 + $0x304] sm:$0xf]
  %v219 = vld [vmem:[%s0 + $0x308] sm:$0xf]
  %v220 = vld [vmem:[%s0 + $0x30c] sm:$0xf]
  %v221 = vld [vmem:[%s0 + $0x310] sm:$0xf]
  %v222 = vld [vmem:[%s0 + $0x314] sm:$0xf]
  %v223 = vld [vmem:[%s0 + $0x318] sm:$0xf]
  %v224 = vld [vmem:[%s0 + $0x31c] sm:$0xf]
  %v225 = vld [vmem:[%s0 + $0x320] sm:$0xf]
  %v226 = vld [vmem:[%s0 + $0x324] sm:$0xf]
  %v227 = vld [vmem:[%s0 + $0x328] sm:$0xf]
  %v228 = vld [vmem:[%s0 + $0x32c] sm:$0xf]
  %v229 = vld [vmem:[%s0 + $0x330] sm:$0xf]
  %v230 = vld [vmem:[%s0 + $0x334] sm:$0xf]
  %v231 = vld [vmem:[%s0 + $0x338] sm:$0xf]
  %v232 = vld [vmem:[%s0 + $0x33c] sm:$0xf]
  %v233 = vld [vmem:[%s0 + $0x340] sm:$0xf]
  %v234 = vld [vmem:[%s0 + $0x344] sm:$0xf]
  %v235 = vld [vmem:[%s0 + $0x348] sm:$0xf]
  %v236 = vld [vmem:[%s0 + $0x34c] sm:$0xf]
  %v237 = vld [vmem:[%s0 + $0x350] sm:$0xf]
  %v238 = vld [vmem:[%s0 + $0x354] sm:$0xf]
  %v239 = vld [vmem:[%s0 + $0x358] sm:$0xf]
  %v240 = vld [vmem:[%s0 + $0x35c] sm:$0xf]
  %v241 = vld [vmem:[%s0 + $0x360] sm:$0xf]
  %v242 = vld [vmem:[%s0 + $0x364] sm:$0xf]
  %v243 = vld [vmem:[%s0 + $0x368] sm:$0xf]
  %v244 = vld [vmem:[%s0 + $0x36c] sm:$0xf]
  %v245 = vld [vmem:[%s0 + $0x370] sm:$0xf]
  %v246 = vld [vmem:[%s0 + $0x374] sm:$0xf]
  %v247 = vld [vmem:[%s0 + $0x378] sm:$0xf]
  %v248 = vld [vmem:[%s0 + $0x37c] sm:$0xf]
  %v249 = vld [vmem:[%s0 + $0x380] sm:$0xf]
  %v250 = vld [vmem:[%s0 + $0x384] sm:$0xf]
  %v251 = vld [vmem:[%s0 + $0x388] sm:$0xf]
  %v252 = vld [vmem:[%s0 + $0x38c] sm:$0xf]
  %v253 = vld [vmem:[%s0 + $0x390] sm:$0xf]
  %v254 = vld [vmem:[%s0 + $0x394] sm:$0xf]
  %v255 = vld [vmem:[%s0 + $0x398] sm:$0xf]
  %v256 = vld [vmem:[%s0 + $0x39c] sm:$0xf]
  %v257 = vld [vmem:[%s0 + $0x3a0] sm:$0xf]
  %v258 = vld [vmem:[%s0 + $0x3a4] sm:$0xf]
  %v259 = vld [vmem:[%s0 + $0x3a8] sm:$0xf]
  %v260 = vld [vmem:[%s0 + $0x3ac] sm:$0xf]
  %v261 = vld [vmem:[%s0 + $0x3b0] sm:$0xf]
  %v262 = vld [vmem:[%s0 + $0x3b4] sm:$0xf]
  %v263 = vld [vmem:[%s0 + $0x3b8] sm:$0xf]
  %v264 = vld [vmem:[%s0 + $0x3bc] sm:$0xf]
  %v265 = vld [vmem:[%s0 + $0x3c0] sm:$0xf]
  %v266 = vld [vmem:[%s0 + $0x3c4] sm:$0xf]
  %v267 = vld [vmem:[%s0 + $0x3c8] sm:$0xf]
  %v268 = vld [vmem:[%s0 + $0x3cc] sm:$0xf]
  %v269 = vld [vmem:[%s0 + $0x3d0] sm:$0xf]
  %v270 = vld [vmem:[%s0 + $0x3d4] sm:$0xf]
  %v271 = vld [vmem:[%s0 + $0x3d8] sm:$0xf]
  %v272 = vld [vmem:[%s0 + $0x3dc] sm:$0xf]
  %v273 = vld [vmem:[%s0 + $0x3e0] sm:$0xf]
  %v274 = vld [vmem:[%s0 + $0x3e4] sm:$0xf]
  %v275 = vld [vmem:[%s0 + $0x3e8] sm:$0xf]
  %v276 = vld [vmem:[%s0 + $0x3ec] sm:$0xf]
  %v277 = vld [vmem:[%s0 + $0x3f0] sm:$0xf]
  %v278 = vld [vmem:[%s0 + $0x3f4] sm:$0xf]
  %v279 = vld [vmem:[%s0 + $0x3f8] sm:$0xf]
  %v280 = vld [vmem:[%s0 + $0x3fc] sm:$0xf]
  %v289 = vunpack.c.l.b16 %v17
  %v290 = vunpack.c.h.b16 %v17
  %v291 = vunpack.c.l.b16 %v18
  %v292 = vunpack.c.h.b16 %v18
  %v293 = vunpack.c.l.b16 %v19
  %v294 = vunpack.c.h.b16 %v19
  %v295 = vunpack.c.l.b16 %v20
  %v296 = vunpack.c.h.b16 %v20
  %v297 = vunpack.c.l.b16 %v21
  %v298 = vunpack.c.h.b16 %v21
  %v299 = vunpack.c.l.b16 %v22
  %v300 = vunpack.c.h.b16 %v22
  %v301 = vunpack.c.l.b16 %v23
  %v302 = vunpack.c.h.b16 %v23
  %v303 = vunpack.c.l.b16 %v24
  %v304 = vunpack.c.h.b16 %v24
  %v305 = vpack.c.b16 %v289, %v289
  %v306 = vpack.c.b16 %v290, %v290
  %v307 = vpack.c.b16 %v291, %v291
  %v308 = vpack.c.b16 %v292, %v292
  %v309 = vpack.c.b16 %v293, %v293
  %v310 = vpack.c.b16 %v294, %v294
  %v311 = vpack.c.b16 %v295, %v295
  %v312 = vpack.c.b16 %v296, %v296
  %v313 = vpack.c.b16 %v297, %v297
  %v314 = vpack.c.b16 %v298, %v298
  %v315 = vpack.c.b16 %v299, %v299
  %v316 = vpack.c.b16 %v300, %v300
  %v317 = vpack.c.b16 %v301, %v301
  %v318 = vpack.c.b16 %v302, %v302
  %v319 = vpack.c.b16 %v303, %v303
  %v320 = vpack.c.b16 %v304, %v304
  %v593 = vunpack.c.l.b16 %v25
  %v594 = vunpack.c.l.b16 %v26
  %v595 = vunpack.c.l.b16 %v27
  %v596 = vunpack.c.l.b16 %v28
  %v597 = vunpack.c.l.b16 %v29
  %v598 = vunpack.c.l.b16 %v30
  %v599 = vunpack.c.l.b16 %v31
  %v600 = vunpack.c.l.b16 %v32
  %v601 = vunpack.c.l.b16 %v33
  %v602 = vunpack.c.l.b16 %v34
  %v603 = vunpack.c.l.b16 %v35
  %v604 = vunpack.c.l.b16 %v36
  %v605 = vunpack.c.l.b16 %v37
  %v606 = vunpack.c.l.b16 %v38
  %v607 = vunpack.c.l.b16 %v39
  %v608 = vunpack.c.l.b16 %v40
  %v609 = vunpack.c.l.b16 %v41
  %v610 = vunpack.c.l.b16 %v42
  %v611 = vunpack.c.l.b16 %v43
  %v612 = vunpack.c.l.b16 %v44
  %v613 = vunpack.c.l.b16 %v45
  %v614 = vunpack.c.l.b16 %v46
  %v615 = vunpack.c.l.b16 %v47
  %v616 = vunpack.c.l.b16 %v48
  %v617 = vunpack.c.l.b16 %v49
  %v618 = vunpack.c.l.b16 %v50
  %v619 = vunpack.c.l.b16 %v51
  %v620 = vunpack.c.l.b16 %v52
  %v621 = vunpack.c.l.b16 %v53
  %v622 = vunpack.c.l.b16 %v54
  %v623 = vunpack.c.l.b16 %v55
  %v624 = vunpack.c.l.b16 %v56
  %v625 = vunpack.c.l.b16 %v57
  %v626 = vunpack.c.l.b16 %v58
  %v627 = vunpack.c.l.b16 %v59
  %v628 = vunpack.c.l.b16 %v60
  %v629 = vunpack.c.l.b16 %v61
  %v630 = vunpack.c.l.b16 %v62
  %v631 = vunpack.c.l.b16 %v63
  %v632 = vunpack.c.l.b16 %v64
  %v633 = vunpack.c.l.b16 %v65
  %v634 = vunpack.c.l.b16 %v66
  %v635 = vunpack.c.l.b16 %v67
  %v636 = vunpack.c.l.b16 %v68
  %v637 = vunpack.c.l.b16 %v69
  %v638 = vunpack.c.l.b16 %v70
  %v639 = vunpack.c.l.b16 %v71
  %v640 = vunpack.c.l.b16 %v72
  %v641 = vunpack.c.l.b16 %v73
  %v642 = vunpack.c.l.b16 %v74
  %v643 = vunpack.c.l.b16 %v75
  %v644 = vunpack.c.l.b16 %v76
  %v645 = vunpack.c.l.b16 %v77
  %v646 = vunpack.c.l.b16 %v78
  %v647 = vunpack.c.l.b16 %v79
  %v648 = vunpack.c.l.b16 %v80
  %v649 = vunpack.c.l.b16 %v81
  %v650 = vunpack.c.l.b16 %v82
  %v651 = vunpack.c.l.b16 %v83
  %v652 = vunpack.c.l.b16 %v84
  %v653 = vunpack.c.l.b16 %v85
  %v654 = vunpack.c.l.b16 %v86
  %v655 = vunpack.c.l.b16 %v87
  %v656 = vunpack.c.l.b16 %v88
  %v657 = vunpack.c.l.b16 %v89
  %v658 = vunpack.c.l.b16 %v90
  %v659 = vunpack.c.l.b16 %v91
  %v660 = vunpack.c.l.b16 %v92
  %v661 = vunpack.c.l.b16 %v93
  %v662 = vunpack.c.l.b16 %v94
  %v663 = vunpack.c.l.b16 %v95
  %v664 = vunpack.c.l.b16 %v96
  %v665 = vunpack.c.l.b16 %v97
  %v666 = vunpack.c.l.b16 %v98
  %v667 = vunpack.c.l.b16 %v99
  %v668 = vunpack.c.l.b16 %v100
  %v669 = vunpack.c.l.b16 %v101
  %v670 = vunpack.c.l.b16 %v102
  %v671 = vunpack.c.l.b16 %v103
  %v672 = vunpack.c.l.b16 %v104
  %v673 = vunpack.c.l.b16 %v105
  %v674 = vunpack.c.l.b16 %v106
  %v675 = vunpack.c.l.b16 %v107
  %v676 = vunpack.c.l.b16 %v108
  %v677 = vunpack.c.l.b16 %v109
  %v678 = vunpack.c.l.b16 %v110
  %v679 = vunpack.c.l.b16 %v111
  %v680 = vunpack.c.l.b16 %v112
  %v681 = vunpack.c.l.b16 %v113
  %v682 = vunpack.c.l.b16 %v114
  %v683 = vunpack.c.l.b16 %v115
  %v684 = vunpack.c.l.b16 %v116
  %v685 = vunpack.c.l.b16 %v117
  %v686 = vunpack.c.l.b16 %v118
  %v687 = vunpack.c.l.b16 %v119
  %v688 = vunpack.c.l.b16 %v120
  %v689 = vunpack.c.l.b16 %v121
  %v690 = vunpack.c.l.b16 %v122
  %v691 = vunpack.c.l.b16 %v123
  %v692 = vunpack.c.l.b16 %v124
  %v693 = vunpack.c.l.b16 %v125
  %v694 = vunpack.c.l.b16 %v126
  %v695 = vunpack.c.l.b16 %v127
  %v696 = vunpack.c.l.b16 %v128
  %v697 = vunpack.c.l.b16 %v129
  %v698 = vunpack.c.l.b16 %v130
  %v699 = vunpack.c.l.b16 %v131
  %v700 = vunpack.c.l.b16 %v132
  %v701 = vunpack.c.l.b16 %v133
  %v702 = vunpack.c.l.b16 %v134
  %v703 = vunpack.c.l.b16 %v135
  %v704 = vunpack.c.l.b16 %v136
  %v705 = vunpack.c.l.b16 %v137
  %v706 = vunpack.c.l.b16 %v138
  %v707 = vunpack.c.l.b16 %v139
  %v708 = vunpack.c.l.b16 %v140
  %v709 = vunpack.c.l.b16 %v141
  %v710 = vunpack.c.l.b16 %v142
  %v711 = vunpack.c.l.b16 %v143
  %v712 = vunpack.c.l.b16 %v144
  %v713 = vunpack.c.l.b16 %v145
  %v714 = vunpack.c.l.b16 %v146
  %v715 = vunpack.c.l.b16 %v147
  %v716 = vunpack.c.l.b16 %v148
  %v717 = vunpack.c.l.b16 %v149
  %v718 = vunpack.c.l.b16 %v150
  %v719 = vunpack.c.l.b16 %v151
  %v720 = vunpack.c.l.b16 %v152
  %v721 = vunpack.c.l.b16 %v153
  %v722 = vunpack.c.l.b16 %v154
  %v723 = vunpack.c.l.b16 %v155
  %v724 = vunpack.c.l.b16 %v156
  %v725 = vunpack.c.l.b16 %v157
  %v726 = vunpack.c.l.b16 %v158
  %v727 = vunpack.c.l.b16 %v159
  %v728 = vunpack.c.l.b16 %v160
  %v729 = vunpack.c.l.b16 %v161
  %v730 = vunpack.c.l.b16 %v162
  %v731 = vunpack.c.l.b16 %v163
  %v732 = vunpack.c.l.b16 %v164
  %v733 = vunpack.c.l.b16 %v165
  %v734 = vunpack.c.l.b16 %v166
  %v735 = vunpack.c.l.b16 %v167
  %v736 = vunpack.c.l.b16 %v168
  %v737 = vunpack.c.l.b16 %v169
  %v738 = vunpack.c.l.b16 %v170
  %v739 = vunpack.c.l.b16 %v171
  %v740 = vunpack.c.l.b16 %v172
  %v741 = vunpack.c.l.b16 %v173
  %v742 = vunpack.c.l.b16 %v174
  %v743 = vunpack.c.l.b16 %v175
  %v744 = vunpack.c.l.b16 %v176
  %v745 = vunpack.c.l.b16 %v177
  %v746 = vunpack.c.l.b16 %v178
  %v747 = vunpack.c.l.b16 %v179
  %v748 = vunpack.c.l.b16 %v180
  %v749 = vunpack.c.l.b16 %v181
  %v750 = vunpack.c.l.b16 %v182
  %v751 = vunpack.c.l.b16 %v183
  %v752 = vunpack.c.l.b16 %v184
  %v753 = vunpack.c.l.b16 %v185
  %v754 = vunpack.c.l.b16 %v186
  %v755 = vunpack.c.l.b16 %v187
  %v756 = vunpack.c.l.b16 %v188
  %v757 = vunpack.c.l.b16 %v189
  %v758 = vunpack.c.l.b16 %v190
  %v759 = vunpack.c.l.b16 %v191
  %v760 = vunpack.c.l.b16 %v192
  %v761 = vunpack.c.l.b16 %v193
  %v762 = vunpack.c.l.b16 %v194
  %v763 = vunpack.c.l.b16 %v195
  %v764 = vunpack.c.l.b16 %v196
  %v765 = vunpack.c.l.b16 %v197
  %v766 = vunpack.c.l.b16 %v198
  %v767 = vunpack.c.l.b16 %v199
  %v768 = vunpack.c.l.b16 %v200
  %v769 = vunpack.c.l.b16 %v201
  %v770 = vunpack.c.l.b16 %v202
  %v771 = vunpack.c.l.b16 %v203
  %v772 = vunpack.c.l.b16 %v204
  %v773 = vunpack.c.l.b16 %v205
  %v774 = vunpack.c.l.b16 %v206
  %v775 = vunpack.c.l.b16 %v207
  %v776 = vunpack.c.l.b16 %v208
  %v777 = vunpack.c.l.b16 %v209
  %v778 = vunpack.c.l.b16 %v210
  %v779 = vunpack.c.l.b16 %v211
  %v780 = vunpack.c.l.b16 %v212
  %v781 = vunpack.c.l.b16 %v213
  %v782 = vunpack.c.l.b16 %v214
  %v783 = vunpack.c.l.b16 %v215
  %v784 = vunpack.c.l.b16 %v216
  %v785 = vunpack.c.l.b16 %v217
  %v786 = vunpack.c.l.b16 %v218
  %v787 = vunpack.c.l.b16 %v219
  %v788 = vunpack.c.l.b16 %v220
  %v789 = vunpack.c.l.b16 %v221
  %v790 = vunpack.c.l.b16 %v222
  %v791 = vunpack.c.l.b16 %v223
  %v792 = vunpack.c.l.b16 %v224
  %v793 = vunpack.c.l.b16 %v225
  %v794 = vunpack.c.l.b16 %v226
  %v795 = vunpack.c.l.b16 %v227
  %v796 = vunpack.c.l.b16 %v228
  %v797 = vunpack.c.l.b16 %v229
  %v798 = vunpack.c.l.b16 %v230
  %v799 = vunpack.c.l.b16 %v231
  %v800 = vunpack.c.l.b16 %v232
  %v801 = vunpack.c.l.b16 %v233
  %v802 = vunpack.c.l.b16 %v234
  %v803 = vunpack.c.l.b16 %v235
  %v804 = vunpack.c.l.b16 %v236
  %v805 = vunpack.c.l.b16 %v237
  %v806 = vunpack.c.l.b16 %v238
  %v807 = vunpack.c.l.b16 %v239
  %v808 = vunpack.c.l.b16 %v240
  %v809 = vunpack.c.l.b16 %v241
  %v810 = vunpack.c.l.b16 %v242
  %v811 = vunpack.c.l.b16 %v243
  %v812 = vunpack.c.l.b16 %v244
  %v813 = vunpack.c.l.b16 %v245
  %v814 = vunpack.c.l.b16 %v246
  %v815 = vunpack.c.l.b16 %v247
  %v816 = vunpack.c.l.b16 %v248
  %v817 = vunpack.c.l.b16 %v249
  %v818 = vunpack.c.l.b16 %v250
  %v819 = vunpack.c.l.b16 %v251
  %v820 = vunpack.c.l.b16 %v252
  %v821 = vunpack.c.l.b16 %v253
  %v822 = vunpack.c.l.b16 %v254
  %v823 = vunpack.c.l.b16 %v255
  %v824 = vunpack.c.l.b16 %v256
  %v825 = vunpack.c.l.b16 %v257
  %v826 = vunpack.c.l.b16 %v258
  %v827 = vunpack.c.l.b16 %v259
  %v828 = vunpack.c.l.b16 %v260
  %v829 = vunpack.c.l.b16 %v261
  %v830 = vunpack.c.l.b16 %v262
  %v831 = vunpack.c.l.b16 %v263
  %v832 = vunpack.c.l.b16 %v264
  %v833 = vunpack.c.l.b16 %v265
  %v834 = vunpack.c.l.b16 %v266
  %v835 = vunpack.c.l.b16 %v267
  %v836 = vunpack.c.l.b16 %v268
  %v837 = vunpack.c.l.b16 %v269
  %v838 = vunpack.c.l.b16 %v270
  %v839 = vunpack.c.l.b16 %v271
  %v840 = vunpack.c.l.b16 %v272
  %v841 = vunpack.c.l.b16 %v273
  %v842 = vunpack.c.l.b16 %v274
  %v843 = vunpack.c.l.b16 %v275
  %v844 = vunpack.c.l.b16 %v276
  %v845 = vunpack.c.l.b16 %v277
  %v846 = vunpack.c.l.b16 %v278
  %v847 = vunpack.c.l.b16 %v279
  %v848 = vunpack.c.l.b16 %v280
  %v849 = vpack.c.b16 %v594, %v593
  %v850 = vpack.c.b16 %v596, %v595
  %v851 = vpack.c.b16 %v598, %v597
  %v852 = vpack.c.b16 %v600, %v599
  %v853 = vpack.c.b16 %v602, %v601
  %v854 = vpack.c.b16 %v604, %v603
  %v855 = vpack.c.b16 %v606, %v605
  %v856 = vpack.c.b16 %v608, %v607
  %v857 = vpack.c.b16 %v610, %v609
  %v858 = vpack.c.b16 %v612, %v611
  %v859 = vpack.c.b16 %v614, %v613
  %v860 = vpack.c.b16 %v616, %v615
  %v861 = vpack.c.b16 %v618, %v617
  %v862 = vpack.c.b16 %v620, %v619
  %v863 = vpack.c.b16 %v622, %v621
  %v864 = vpack.c.b16 %v624, %v623
  %v865 = vpack.c.b16 %v626, %v625
  %v866 = vpack.c.b16 %v628, %v627
  %v867 = vpack.c.b16 %v630, %v629
  %v868 = vpack.c.b16 %v632, %v631
  %v869 = vpack.c.b16 %v634, %v633
  %v870 = vpack.c.b16 %v636, %v635
  %v871 = vpack.c.b16 %v638, %v637
  %v872 = vpack.c.b16 %v640, %v639
  %v873 = vpack.c.b16 %v642, %v641
  %v874 = vpack.c.b16 %v644, %v643
  %v875 = vpack.c.b16 %v646, %v645
  %v876 = vpack.c.b16 %v648, %v647
  %v877 = vpack.c.b16 %v650, %v649
  %v878 = vpack.c.b16 %v652, %v651
  %v879 = vpack.c.b16 %v654, %v653
  %v880 = vpack.c.b16 %v656, %v655
  %v881 = vpack.c.b16 %v658, %v657
  %v882 = vpack.c.b16 %v660, %v659
  %v883 = vpack.c.b16 %v662, %v661
  %v884 = vpack.c.b16 %v664, %v663
  %v885 = vpack.c.b16 %v666, %v665
  %v886 = vpack.c.b16 %v668, %v667
  %v887 = vpack.c.b16 %v670, %v669
  %v888 = vpack.c.b16 %v672, %v671
  %v889 = vpack.c.b16 %v674, %v673
  %v890 = vpack.c.b16 %v676, %v675
  %v891 = vpack.c.b16 %v678, %v677
  %v892 = vpack.c.b16 %v680, %v679
  %v893 = vpack.c.b16 %v682, %v681
  %v894 = vpack.c.b16 %v684, %v683
  %v895 = vpack.c.b16 %v686, %v685
  %v896 = vpack.c.b16 %v688, %v687
  %v897 = vpack.c.b16 %v690, %v689
  %v898 = vpack.c.b16 %v692, %v691
  %v899 = vpack.c.b16 %v694, %v693
  %v900 = vpack.c.b16 %v696, %v695
  %v901 = vpack.c.b16 %v698, %v697
  %v902 = vpack.c.b16 %v700, %v699
  %v903 = vpack.c.b16 %v702, %v701
  %v904 = vpack.c.b16 %v704, %v703
  %v905 = vpack.c.b16 %v706, %v705
  %v906 = vpack.c.b16 %v708, %v707
  %v907 = vpack.c.b16 %v710, %v709
  %v908 = vpack.c.b16 %v712, %v711
  %v909 = vpack.c.b16 %v714, %v713
  %v910 = vpack.c.b16 %v716, %v715
  %v911 = vpack.c.b16 %v718, %v717
  %v912 = vpack.c.b16 %v720, %v719
  %v913 = vpack.c.b16 %v722, %v721
  %v914 = vpack.c.b16 %v724, %v723
  %v915 = vpack.c.b16 %v726, %v725
  %v916 = vpack.c.b16 %v728, %v727
  %v917 = vpack.c.b16 %v730, %v729
  %v918 = vpack.c.b16 %v732, %v731
  %v919 = vpack.c.b16 %v734, %v733
  %v920 = vpack.c.b16 %v736, %v735
  %v921 = vpack.c.b16 %v738, %v737
  %v922 = vpack.c.b16 %v740, %v739
  %v923 = vpack.c.b16 %v742, %v741
  %v924 = vpack.c.b16 %v744, %v743
  %v925 = vpack.c.b16 %v746, %v745
  %v926 = vpack.c.b16 %v748, %v747
  %v927 = vpack.c.b16 %v750, %v749
  %v928 = vpack.c.b16 %v752, %v751
  %v929 = vpack.c.b16 %v754, %v753
  %v930 = vpack.c.b16 %v756, %v755
  %v931 = vpack.c.b16 %v758, %v757
  %v932 = vpack.c.b16 %v760, %v759
  %v933 = vpack.c.b16 %v762, %v761
  %v934 = vpack.c.b16 %v764, %v763
  %v935 = vpack.c.b16 %v766, %v765
  %v936 = vpack.c.b16 %v768, %v767
  %v937 = vpack.c.b16 %v770, %v769
  %v938 = vpack.c.b16 %v772, %v771
  %v939 = vpack.c.b16 %v774, %v773
  %v940 = vpack.c.b16 %v776, %v775
  %v941 = vpack.c.b16 %v778, %v777
  %v942 = vpack.c.b16 %v780, %v779
  %v943 = vpack.c.b16 %v782, %v781
  %v944 = vpack.c.b16 %v784, %v783
  %v945 = vpack.c.b16 %v786, %v785
  %v946 = vpack.c.b16 %v788, %v787
  %v947 = vpack.c.b16 %v790, %v789
  %v948 = vpack.c.b16 %v792, %v791
  %v949 = vpack.c.b16 %v794, %v793
  %v950 = vpack.c.b16 %v796, %v795
  %v951 = vpack.c.b16 %v798, %v797
  %v952 = vpack.c.b16 %v800, %v799
  %v953 = vpack.c.b16 %v802, %v801
  %v954 = vpack.c.b16 %v804, %v803
  %v955 = vpack.c.b16 %v806, %v805
  %v956 = vpack.c.b16 %v808, %v807
  %v957 = vpack.c.b16 %v810, %v809
  %v958 = vpack.c.b16 %v812, %v811
  %v959 = vpack.c.b16 %v814, %v813
  %v960 = vpack.c.b16 %v816, %v815
  %v961 = vpack.c.b16 %v818, %v817
  %v962 = vpack.c.b16 %v820, %v819
  %v963 = vpack.c.b16 %v822, %v821
  %v964 = vpack.c.b16 %v824, %v823
  %v965 = vpack.c.b16 %v826, %v825
  %v966 = vpack.c.b16 %v828, %v827
  %v967 = vpack.c.b16 %v830, %v829
  %v968 = vpack.c.b16 %v832, %v831
  %v969 = vpack.c.b16 %v834, %v833
  %v970 = vpack.c.b16 %v836, %v835
  %v971 = vpack.c.b16 %v838, %v837
  %v972 = vpack.c.b16 %v840, %v839
  %v973 = vpack.c.b16 %v842, %v841
  %v974 = vpack.c.b16 %v844, %v843
  %v975 = vpack.c.b16 %v846, %v845
  %v976 = vpack.c.b16 %v848, %v847
  %1105 = vmatpush.bf16.msra.mxu0 %v856
  %1106 = vmatpush.bf16.msra.mxu0 %v855
  %1107 = vmatpush.bf16.msra.mxu0 %v854
  %1108 = vmatpush.bf16.msra.mxu0 %v853
  %1109 = vmatpush.bf16.msra.mxu0 %v852
  %1110 = vmatpush.bf16.msra.mxu0 %v851
  %1111 = vmatpush.bf16.msra.mxu0 %v850
  %1112 = vmatpush.bf16.msra.mxu0 %v849
  %1113 = vmatmul.bf16.gmra.mxu0 %v305
  %v1114 = vpop.f32.mrf.mxu0
  %v1115 = vadd.f32 0.0, %v1114
  %v1116 = vpop.f32.mrf.mxu0
  %1117 = vdwg.mxu0
  %1118 = vmatpush.bf16.msra.mxu0 %v864
  %1119 = vmatpush.bf16.msra.mxu0 %v863
  %1120 = vmatpush.bf16.msra.mxu0 %v862
  %1121 = vmatpush.bf16.msra.mxu0 %v861
  %1122 = vmatpush.bf16.msra.mxu0 %v860
  %1123 = vmatpush.bf16.msra.mxu0 %v859
  %1124 = vmatpush.bf16.msra.mxu0 %v858
  %1125 = vmatpush.bf16.msra.mxu0 %v857
  %1126 = vmatmul.bf16.gmra.mxu0 %v306
  %v1127 = vpop.f32.mrf.mxu0
  %v1128 = vadd.f32 %v1115, %v1127
  %v1129 = vpop.f32.mrf.mxu0
  %1130 = vdwg.mxu0
  %1131 = vmatpush.bf16.msra.mxu0 %v872
  %1132 = vmatpush.bf16.msra.mxu0 %v871
  %1133 = vmatpush.bf16.msra.mxu0 %v870
  %1134 = vmatpush.bf16.msra.mxu0 %v869
  %1135 = vmatpush.bf16.msra.mxu0 %v868
  %1136 = vmatpush.bf16.msra.mxu0 %v867
  %1137 = vmatpush.bf16.msra.mxu0 %v866
  %1138 = vmatpush.bf16.msra.mxu0 %v865
  %1139 = vmatmul.bf16.gmra.mxu0 %v307
  %v1140 = vpop.f32.mrf.mxu0
  %v1141 = vadd.f32 %v1128, %v1140
  %v1142 = vpop.f32.mrf.mxu0
  %1143 = vdwg.mxu0
  %1144 = vmatpush.bf16.msra.mxu0 %v880
  %1145 = vmatpush.bf16.msra.mxu0 %v879
  %1146 = vmatpush.bf16.msra.mxu0 %v878
  %1147 = vmatpush.bf16.msra.mxu0 %v877
  %1148 = vmatpush.bf16.msra.mxu0 %v876
  %1149 = vmatpush.bf16.msra.mxu0 %v875
  %1150 = vmatpush.bf16.msra.mxu0 %v874
  %1151 = vmatpush.bf16.msra.mxu0 %v873
  %1152 = vmatmul.bf16.gmra.mxu0 %v308
  %v1153 = vpop.f32.mrf.mxu0
  %v1154 = vadd.f32 %v1141, %v1153
  %v1155 = vpop.f32.mrf.mxu0
  %1156 = vdwg.mxu0
  %1157 = vmatpush.bf16.msra.mxu0 %v888
  %1158 = vmatpush.bf16.msra.mxu0 %v887
  %1159 = vmatpush.bf16.msra.mxu0 %v886
  %1160 = vmatpush.bf16.msra.mxu0 %v885
  %1161 = vmatpush.bf16.msra.mxu0 %v884
  %1162 = vmatpush.bf16.msra.mxu0 %v883
  %1163 = vmatpush.bf16.msra.mxu0 %v882
  %1164 = vmatpush.bf16.msra.mxu0 %v881
  %1165 = vmatmul.bf16.gmra.mxu0 %v309
  %v1166 = vpop.f32.mrf.mxu0
  %v1167 = vadd.f32 %v1154, %v1166
  %v1168 = vpop.f32.mrf.mxu0
  %1169 = vdwg.mxu0
  %1170 = vmatpush.bf16.msra.mxu0 %v896
  %1171 = vmatpush.bf16.msra.mxu0 %v895
  %1172 = vmatpush.bf16.msra.mxu0 %v894
  %1173 = vmatpush.bf16.msra.mxu0 %v893
  %1174 = vmatpush.bf16.msra.mxu0 %v892
  %1175 = vmatpush.bf16.msra.mxu0 %v891
  %1176 = vmatpush.bf16.msra.mxu0 %v890
  %1177 = vmatpush.bf16.msra.mxu0 %v889
  %1178 = vmatmul.bf16.gmra.mxu0 %v310
  %v1179 = vpop.f32.mrf.mxu0
  %v1180 = vadd.f32 %v1167, %v1179
  %v1181 = vpop.f32.mrf.mxu0
  %1182 = vdwg.mxu0
  %1183 = vmatpush.bf16.msra.mxu0 %v904
  %1184 = vmatpush.bf16.msra.mxu0 %v903
  %1185 = vmatpush.bf16.msra.mxu0 %v902
  %1186 = vmatpush.bf16.msra.mxu0 %v901
  %1187 = vmatpush.bf16.msra.mxu0 %v900
  %1188 = vmatpush.bf16.msra.mxu0 %v899
  %1189 = vmatpush.bf16.msra.mxu0 %v898
  %1190 = vmatpush.bf16.msra.mxu0 %v897
  %1191 = vmatmul.bf16.gmra.mxu0 %v311
  %v1192 = vpop.f32.mrf.mxu0
  %v1193 = vadd.f32 %v1180, %v1192
  %v1194 = vpop.f32.mrf.mxu0
  %1195 = vdwg.mxu0
  %1196 = vmatpush.bf16.msra.mxu0 %v912
  %1197 = vmatpush.bf16.msra.mxu0 %v911
  %1198 = vmatpush.bf16.msra.mxu0 %v910
  %1199 = vmatpush.bf16.msra.mxu0 %v909
  %1200 = vmatpush.bf16.msra.mxu0 %v908
  %1201 = vmatpush.bf16.msra.mxu0 %v907
  %1202 = vmatpush.bf16.msra.mxu0 %v906
  %1203 = vmatpush.bf16.msra.mxu0 %v905
  %1204 = vmatmul.bf16.gmra.mxu0 %v312
  %v1205 = vpop.f32.mrf.mxu0
  %v1206 = vadd.f32 %v1193, %v1205
  %v1207 = vpop.f32.mrf.mxu0
  %1208 = vdwg.mxu0
  %1209 = vmatpush.bf16.msra.mxu0 %v920
  %1210 = vmatpush.bf16.msra.mxu0 %v919
  %1211 = vmatpush.bf16.msra.mxu0 %v918
  %1212 = vmatpush.bf16.msra.mxu0 %v917
  %1213 = vmatpush.bf16.msra.mxu0 %v916
  %1214 = vmatpush.bf16.msra.mxu0 %v915
  %1215 = vmatpush.bf16.msra.mxu0 %v914
  %1216 = vmatpush.bf16.msra.mxu0 %v913
  %1217 = vmatmul.bf16.gmra.mxu0 %v313
  %v1218 = vpop.f32.mrf.mxu0
  %v1219 = vadd.f32 %v1206, %v1218
  %v1220 = vpop.f32.mrf.mxu0
  %1221 = vdwg.mxu0
  %1222 = vmatpush.bf16.msra.mxu0 %v928
  %1223 = vmatpush.bf16.msra.mxu0 %v927
  %1224 = vmatpush.bf16.msra.mxu0 %v926
  %1225 = vmatpush.bf16.msra.mxu0 %v925
  %1226 = vmatpush.bf16.msra.mxu0 %v924
  %1227 = vmatpush.bf16.msra.mxu0 %v923
  %1228 = vmatpush.bf16.msra.mxu0 %v922
  %1229 = vmatpush.bf16.msra.mxu0 %v921
  %1230 = vmatmul.bf16.gmra.mxu0 %v314
  %v1231 = vpop.f32.mrf.mxu0
  %v1232 = vadd.f32 %v1219, %v1231
  %v1233 = vpop.f32.mrf.mxu0
  %1234 = vdwg.mxu0
  %1235 = vmatpush.bf16.msra.mxu0 %v936
  %1236 = vmatpush.bf16.msra.mxu0 %v935
  %1237 = vmatpush.bf16.msra.mxu0 %v934
  %1238 = vmatpush.bf16.msra.mxu0 %v933
  %1239 = vmatpush.bf16.msra.mxu0 %v932
  %1240 = vmatpush.bf16.msra.mxu0 %v931
  %1241 = vmatpush.bf16.msra.mxu0 %v930
  %1242 = vmatpush.bf16.msra.mxu0 %v929
  %1243 = vmatmul.bf16.gmra.mxu0 %v315
  %v1244 = vpop.f32.mrf.mxu0
  %v1245 = vadd.f32 %v1232, %v1244
  %v1246 = vpop.f32.mrf.mxu0
  %1247 = vdwg.mxu0
  %1248 = vmatpush.bf16.msra.mxu0 %v944
  %1249 = vmatpush.bf16.msra.mxu0 %v943
  %1250 = vmatpush.bf16.msra.mxu0 %v942
  %1251 = vmatpush.bf16.msra.mxu0 %v941
  %1252 = vmatpush.bf16.msra.mxu0 %v940
  %1253 = vmatpush.bf16.msra.mxu0 %v939
  %1254 = vmatpush.bf16.msra.mxu0 %v938
  %1255 = vmatpush.bf16.msra.mxu0 %v937
  %1256 = vmatmul.bf16.gmra.mxu0 %v316
  %v1257 = vpop.f32.mrf.mxu0
  %v1258 = vadd.f32 %v1245, %v1257
  %v1259 = vpop.f32.mrf.mxu0
  %1260 = vdwg.mxu0
  %1261 = vmatpush.bf16.msra.mxu0 %v952
  %1262 = vmatpush.bf16.msra.mxu0 %v951
  %1263 = vmatpush.bf16.msra.mxu0 %v950
  %1264 = vmatpush.bf16.msra.mxu0 %v949
  %1265 = vmatpush.bf16.msra.mxu0 %v948
  %1266 = vmatpush.bf16.msra.mxu0 %v947
  %1267 = vmatpush.bf16.msra.mxu0 %v946
  %1268 = vmatpush.bf16.msra.mxu0 %v945
  %1269 = vmatmul.bf16.gmra.mxu0 %v317
  %v1270 = vpop.f32.mrf.mxu0
  %v1271 = vadd.f32 %v1258, %v1270
  %v1272 = vpop.f32.mrf.mxu0
  %1273 = vdwg.mxu0
  %1274 = vmatpush.bf16.msra.mxu0 %v960
  %1275 = vmatpush.bf16.msra.mxu0 %v959
  %1276 = vmatpush.bf16.msra.mxu0 %v958
  %1277 = vmatpush.bf16.msra.mxu0 %v957
  %1278 = vmatpush.bf16.msra.mxu0 %v956
  %1279 = vmatpush.bf16.msra.mxu0 %v955
  %1280 = vmatpush.bf16.msra.mxu0 %v954
  %1281 = vmatpush.bf16.msra.mxu0 %v953
  %1282 = vmatmul.bf16.gmra.mxu0 %v318
  %v1283 = vpop.f32.mrf.mxu0
  %v1284 = vadd.f32 %v1271, %v1283
  %v1285 = vpop.f32.mrf.mxu0
  %1286 = vdwg.mxu0
  %1287 = vmatpush.bf16.msra.mxu0 %v968
  %1288 = vmatpush.bf16.msra.mxu0 %v967
  %1289 = vmatpush.bf16.msra.mxu0 %v966
  %1290 = vmatpush.bf16.msra.mxu0 %v965
  %1291 = vmatpush.bf16.msra.mxu0 %v964
  %1292 = vmatpush.bf16.msra.mxu0 %v963
  %1293 = vmatpush.bf16.msra.mxu0 %v962
  %1294 = vmatpush.bf16.msra.mxu0 %v961
  %1295 = vmatmul.bf16.gmra.mxu0 %v319
  %v1296 = vpop.f32.mrf.mxu0
  %v1297 = vadd.f32 %v1284, %v1296
  %v1298 = vpop.f32.mrf.mxu0
  %1299 = vdwg.mxu0
  %1300 = vmatpush.bf16.msra.mxu0 %v976
  %1301 = vmatpush.bf16.msra.mxu0 %v975
  %1302 = vmatpush.bf16.msra.mxu0 %v974
  %1303 = vmatpush.bf16.msra.mxu0 %v973
  %1304 = vmatpush.bf16.msra.mxu0 %v972
  %1305 = vmatpush.bf16.msra.mxu0 %v971
  %1306 = vmatpush.bf16.msra.mxu0 %v970
  %1307 = vmatpush.bf16.msra.mxu0 %v969
  %1308 = vmatmul.bf16.gmra.mxu0 %v320
  %v1309 = vpop.f32.mrf.mxu0
  %v1310 = vadd.f32 %v1297, %v1309
  %v1311 = vpop.f32.mrf.mxu0
  %1312 = vdwg.mxu0
  %v1313 = vmax.f32 %v1310, 0.0
  %vm1314 = vcmask 130048
  %1315 = vst.msk [vmem:[%s3] sm:$0xff] %vm1314, %v1313
  %s1316 = scalar_lea.vmem %s0, 1024
  %v1317 = vld [vmem:[%s1316] sm:$0xf]
  %v1318 = vld [vmem:[%s1316 + $0x4] sm:$0xf]
  %v1319 = vld [vmem:[%s1316 + $0x8] sm:$0xf]
  %v1320 = vld [vmem:[%s1316 + $0xc] sm:$0xf]
  %v1321 = vld [vmem:[%s1316 + $0x10] sm:$0xf]
  %v1322 = vld [vmem:[%s1316 + $0x14] sm:$0xf]
  %v1323 = vld [vmem:[%s1316 + $0x18] sm:$0xf]
  %v1324 = vld [vmem:[%s1316 + $0x1c] sm:$0xf]
  %v1325 = vld [vmem:[%s1316 + $0x20] sm:$0xf]
  %v1326 = vld [vmem:[%s1316 + $0x24] sm:$0xf]
  %v1327 = vld [vmem:[%s1316 + $0x28] sm:$0xf]
  %v1328 = vld [vmem:[%s1316 + $0x2c] sm:$0xf]
  %v1329 = vld [vmem:[%s1316 + $0x30] sm:$0xf]
  %v1330 = vld [vmem:[%s1316 + $0x34] sm:$0xf]
  %v1331 = vld [vmem:[%s1316 + $0x38] sm:$0xf]
  %v1332 = vld [vmem:[%s1316 + $0x3c] sm:$0xf]
  %v1333 = vld [vmem:[%s1316 + $0x40] sm:$0xf]
  %v1334 = vld [vmem:[%s1316 + $0x44] sm:$0xf]
  %v1335 = vld [vmem:[%s1316 + $0x48] sm:$0xf]
  %v1336 = vld [vmem:[%s1316 + $0x4c] sm:$0xf]
  %v1337 = vld [vmem:[%s1316 + $0x50] sm:$0xf]
  %v1338 = vld [vmem:[%s1316 + $0x54] sm:$0xf]
  %v1339 = vld [vmem:[%s1316 + $0x58] sm:$0xf]
  %v1340 = vld [vmem:[%s1316 + $0x5c] sm:$0xf]
  %v1341 = vld [vmem:[%s1316 + $0x60] sm:$0xf]
  %v1342 = vld [vmem:[%s1316 + $0x64] sm:$0xf]
  %v1343 = vld [vmem:[%s1316 + $0x68] sm:$0xf]
  %v1344 = vld [vmem:[%s1316 + $0x6c] sm:$0xf]
  %v1345 = vld [vmem:[%s1316 + $0x70] sm:$0xf]
  %v1346 = vld [vmem:[%s1316 + $0x74] sm:$0xf]
  %v1347 = vld [vmem:[%s1316 + $0x78] sm:$0xf]
  %v1348 = vld [vmem:[%s1316 + $0x7c] sm:$0xf]
  %v1349 = vld [vmem:[%s1316 + $0x80] sm:$0xf]
  %v1350 = vld [vmem:[%s1316 + $0x84] sm:$0xf]
  %v1351 = vld [vmem:[%s1316 + $0x88] sm:$0xf]
  %v1352 = vld [vmem:[%s1316 + $0x8c] sm:$0xf]
  %v1353 = vld [vmem:[%s1316 + $0x90] sm:$0xf]
  %v1354 = vld [vmem:[%s1316 + $0x94] sm:$0xf]
  %v1355 = vld [vmem:[%s1316 + $0x98] sm:$0xf]
  %v1356 = vld [vmem:[%s1316 + $0x9c] sm:$0xf]
  %v1357 = vld [vmem:[%s1316 + $0xa0] sm:$0xf]
  %v1358 = vld [vmem:[%s1316 + $0xa4] sm:$0xf]
  %v1359 = vld [vmem:[%s1316 + $0xa8] sm:$0xf]
  %v1360 = vld [vmem:[%s1316 + $0xac] sm:$0xf]
  %v1361 = vld [vmem:[%s1316 + $0xb0] sm:$0xf]
  %v1362 = vld [vmem:[%s1316 + $0xb4] sm:$0xf]
  %v1363 = vld [vmem:[%s1316 + $0xb8] sm:$0xf]
  %v1364 = vld [vmem:[%s1316 + $0xbc] sm:$0xf]
  %v1365 = vld [vmem:[%s1316 + $0xc0] sm:$0xf]
  %v1366 = vld [vmem:[%s1316 + $0xc4] sm:$0xf]
  %v1367 = vld [vmem:[%s1316 + $0xc8] sm:$0xf]
  %v1368 = vld [vmem:[%s1316 + $0xcc] sm:$0xf]
  %v1369 = vld [vmem:[%s1316 + $0xd0] sm:$0xf]
  %v1370 = vld [vmem:[%s1316 + $0xd4] sm:$0xf]
  %v1371 = vld [vmem:[%s1316 + $0xd8] sm:$0xf]
  %v1372 = vld [vmem:[%s1316 + $0xdc] sm:$0xf]
  %v1373 = vld [vmem:[%s1316 + $0xe0] sm:$0xf]
  %v1374 = vld [vmem:[%s1316 + $0xe4] sm:$0xf]
  %v1375 = vld [vmem:[%s1316 + $0xe8] sm:$0xf]
  %v1376 = vld [vmem:[%s1316 + $0xec] sm:$0xf]
  %v1377 = vld [vmem:[%s1316 + $0xf0] sm:$0xf]
  %v1378 = vld [vmem:[%s1316 + $0xf4] sm:$0xf]
  %v1379 = vld [vmem:[%s1316 + $0xf8] sm:$0xf]
  %v1380 = vld [vmem:[%s1316 + $0xfc] sm:$0xf]
  %v1381 = vld [vmem:[%s1316 + $0x100] sm:$0xf]
  %v1382 = vld [vmem:[%s1316 + $0x104] sm:$0xf]
  %v1383 = vld [vmem:[%s1316 + $0x108] sm:$0xf]
  %v1384 = vld [vmem:[%s1316 + $0x10c] sm:$0xf]
  %v1385 = vld [vmem:[%s1316 + $0x110] sm:$0xf]
  %v1386 = vld [vmem:[%s1316 + $0x114] sm:$0xf]
  %v1387 = vld [vmem:[%s1316 + $0x118] sm:$0xf]
  %v1388 = vld [vmem:[%s1316 + $0x11c] sm:$0xf]
  %v1389 = vld [vmem:[%s1316 + $0x120] sm:$0xf]
  %v1390 = vld [vmem:[%s1316 + $0x124] sm:$0xf]
  %v1391 = vld [vmem:[%s1316 + $0x128] sm:$0xf]
  %v1392 = vld [vmem:[%s1316 + $0x12c] sm:$0xf]
  %v1393 = vld [vmem:[%s1316 + $0x130] sm:$0xf]
  %v1394 = vld [vmem:[%s1316 + $0x134] sm:$0xf]
  %v1395 = vld [vmem:[%s1316 + $0x138] sm:$0xf]
  %v1396 = vld [vmem:[%s1316 + $0x13c] sm:$0xf]
  %v1397 = vld [vmem:[%s1316 + $0x140] sm:$0xf]
  %v1398 = vld [vmem:[%s1316 + $0x144] sm:$0xf]
  %v1399 = vld [vmem:[%s1316 + $0x148] sm:$0xf]
  %v1400 = vld [vmem:[%s1316 + $0x14c] sm:$0xf]
  %v1401 = vld [vmem:[%s1316 + $0x150] sm:$0xf]
  %v1402 = vld [vmem:[%s1316 + $0x154] sm:$0xf]
  %v1403 = vld [vmem:[%s1316 + $0x158] sm:$0xf]
  %v1404 = vld [vmem:[%s1316 + $0x15c] sm:$0xf]
  %v1405 = vld [vmem:[%s1316 + $0x160] sm:$0xf]
  %v1406 = vld [vmem:[%s1316 + $0x164] sm:$0xf]
  %v1407 = vld [vmem:[%s1316 + $0x168] sm:$0xf]
  %v1408 = vld [vmem:[%s1316 + $0x16c] sm:$0xf]
  %v1409 = vld [vmem:[%s1316 + $0x170] sm:$0xf]
  %v1410 = vld [vmem:[%s1316 + $0x174] sm:$0xf]
  %v1411 = vld [vmem:[%s1316 + $0x178] sm:$0xf]
  %v1412 = vld [vmem:[%s1316 + $0x17c] sm:$0xf]
  %v1413 = vld [vmem:[%s1316 + $0x180] sm:$0xf]
  %v1414 = vld [vmem:[%s1316 + $0x184] sm:$0xf]
  %v1415 = vld [vmem:[%s1316 + $0x188] sm:$0xf]
  %v1416 = vld [vmem:[%s1316 + $0x18c] sm:$0xf]
  %v1417 = vld [vmem:[%s1316 + $0x190] sm:$0xf]
  %v1418 = vld [vmem:[%s1316 + $0x194] sm:$0xf]
  %v1419 = vld [vmem:[%s1316 + $0x198] sm:$0xf]
  %v1420 = vld [vmem:[%s1316 + $0x19c] sm:$0xf]
  %v1421 = vld [vmem:[%s1316 + $0x1a0] sm:$0xf]
  %v1422 = vld [vmem:[%s1316 + $0x1a4] sm:$0xf]
  %v1423 = vld [vmem:[%s1316 + $0x1a8] sm:$0xf]
  %v1424 = vld [vmem:[%s1316 + $0x1ac] sm:$0xf]
  %v1425 = vld [vmem:[%s1316 + $0x1b0] sm:$0xf]
  %v1426 = vld [vmem:[%s1316 + $0x1b4] sm:$0xf]
  %v1427 = vld [vmem:[%s1316 + $0x1b8] sm:$0xf]
  %v1428 = vld [vmem:[%s1316 + $0x1bc] sm:$0xf]
  %v1429 = vld [vmem:[%s1316 + $0x1c0] sm:$0xf]
  %v1430 = vld [vmem:[%s1316 + $0x1c4] sm:$0xf]
  %v1431 = vld [vmem:[%s1316 + $0x1c8] sm:$0xf]
  %v1432 = vld [vmem:[%s1316 + $0x1cc] sm:$0xf]
  %v1433 = vld [vmem:[%s1316 + $0x1d0] sm:$0xf]
  %v1434 = vld [vmem:[%s1316 + $0x1d4] sm:$0xf]
  %v1435 = vld [vmem:[%s1316 + $0x1d8] sm:$0xf]
  %v1436 = vld [vmem:[%s1316 + $0x1dc] sm:$0xf]
  %v1437 = vld [vmem:[%s1316 + $0x1e0] sm:$0xf]
  %v1438 = vld [vmem:[%s1316 + $0x1e4] sm:$0xf]
  %v1439 = vld [vmem:[%s1316 + $0x1e8] sm:$0xf]
  %v1440 = vld [vmem:[%s1316 + $0x1ec] sm:$0xf]
  %v1441 = vld [vmem:[%s1316 + $0x1f0] sm:$0xf]
  %v1442 = vld [vmem:[%s1316 + $0x1f4] sm:$0xf]
  %v1443 = vld [vmem:[%s1316 + $0x1f8] sm:$0xf]
  %v1444 = vld [vmem:[%s1316 + $0x1fc] sm:$0xf]
  %v1445 = vld [vmem:[%s1316 + $0x200] sm:$0xf]
  %v1446 = vld [vmem:[%s1316 + $0x204] sm:$0xf]
  %v1447 = vld [vmem:[%s1316 + $0x208] sm:$0xf]
  %v1448 = vld [vmem:[%s1316 + $0x20c] sm:$0xf]
  %v1449 = vld [vmem:[%s1316 + $0x210] sm:$0xf]
  %v1450 = vld [vmem:[%s1316 + $0x214] sm:$0xf]
  %v1451 = vld [vmem:[%s1316 + $0x218] sm:$0xf]
  %v1452 = vld [vmem:[%s1316 + $0x21c] sm:$0xf]
  %v1453 = vld [vmem:[%s1316 + $0x220] sm:$0xf]
  %v1454 = vld [vmem:[%s1316 + $0x224] sm:$0xf]
  %v1455 = vld [vmem:[%s1316 + $0x228] sm:$0xf]
  %v1456 = vld [vmem:[%s1316 + $0x22c] sm:$0xf]
  %v1457 = vld [vmem:[%s1316 + $0x230] sm:$0xf]
  %v1458 = vld [vmem:[%s1316 + $0x234] sm:$0xf]
  %v1459 = vld [vmem:[%s1316 + $0x238] sm:$0xf]
  %v1460 = vld [vmem:[%s1316 + $0x23c] sm:$0xf]
  %v1461 = vld [vmem:[%s1316 + $0x240] sm:$0xf]
  %v1462 = vld [vmem:[%s1316 + $0x244] sm:$0xf]
  %v1463 = vld [vmem:[%s1316 + $0x248] sm:$0xf]
  %v1464 = vld [vmem:[%s1316 + $0x24c] sm:$0xf]
  %v1465 = vld [vmem:[%s1316 + $0x250] sm:$0xf]
  %v1466 = vld [vmem:[%s1316 + $0x254] sm:$0xf]
  %v1467 = vld [vmem:[%s1316 + $0x258] sm:$0xf]
  %v1468 = vld [vmem:[%s1316 + $0x25c] sm:$0xf]
  %v1469 = vld [vmem:[%s1316 + $0x260] sm:$0xf]
  %v1470 = vld [vmem:[%s1316 + $0x264] sm:$0xf]
  %v1471 = vld [vmem:[%s1316 + $0x268] sm:$0xf]
  %v1472 = vld [vmem:[%s1316 + $0x26c] sm:$0xf]
  %v1473 = vld [vmem:[%s1316 + $0x270] sm:$0xf]
  %v1474 = vld [vmem:[%s1316 + $0x274] sm:$0xf]
  %v1475 = vld [vmem:[%s1316 + $0x278] sm:$0xf]
  %v1476 = vld [vmem:[%s1316 + $0x27c] sm:$0xf]
  %v1477 = vld [vmem:[%s1316 + $0x280] sm:$0xf]
  %v1478 = vld [vmem:[%s1316 + $0x284] sm:$0xf]
  %v1479 = vld [vmem:[%s1316 + $0x288] sm:$0xf]
  %v1480 = vld [vmem:[%s1316 + $0x28c] sm:$0xf]
  %v1481 = vld [vmem:[%s1316 + $0x290] sm:$0xf]
  %v1482 = vld [vmem:[%s1316 + $0x294] sm:$0xf]
  %v1483 = vld [vmem:[%s1316 + $0x298] sm:$0xf]
  %v1484 = vld [vmem:[%s1316 + $0x29c] sm:$0xf]
  %v1485 = vld [vmem:[%s1316 + $0x2a0] sm:$0xf]
  %v1486 = vld [vmem:[%s1316 + $0x2a4] sm:$0xf]
  %v1487 = vld [vmem:[%s1316 + $0x2a8] sm:$0xf]
  %v1488 = vld [vmem:[%s1316 + $0x2ac] sm:$0xf]
  %v1489 = vld [vmem:[%s1316 + $0x2b0] sm:$0xf]
  %v1490 = vld [vmem:[%s1316 + $0x2b4] sm:$0xf]
  %v1491 = vld [vmem:[%s1316 + $0x2b8] sm:$0xf]
  %v1492 = vld [vmem:[%s1316 + $0x2bc] sm:$0xf]
  %v1493 = vld [vmem:[%s1316 + $0x2c0] sm:$0xf]
  %v1494 = vld [vmem:[%s1316 + $0x2c4] sm:$0xf]
  %v1495 = vld [vmem:[%s1316 + $0x2c8] sm:$0xf]
  %v1496 = vld [vmem:[%s1316 + $0x2cc] sm:$0xf]
  %v1497 = vld [vmem:[%s1316 + $0x2d0] sm:$0xf]
  %v1498 = vld [vmem:[%s1316 + $0x2d4] sm:$0xf]
  %v1499 = vld [vmem:[%s1316 + $0x2d8] sm:$0xf]
  %v1500 = vld [vmem:[%s1316 + $0x2dc] sm:$0xf]
  %v1501 = vld [vmem:[%s1316 + $0x2e0] sm:$0xf]
  %v1502 = vld [vmem:[%s1316 + $0x2e4] sm:$0xf]
  %v1503 = vld [vmem:[%s1316 + $0x2e8] sm:$0xf]
  %v1504 = vld [vmem:[%s1316 + $0x2ec] sm:$0xf]
  %v1505 = vld [vmem:[%s1316 + $0x2f0] sm:$0xf]
  %v1506 = vld [vmem:[%s1316 + $0x2f4] sm:$0xf]
  %v1507 = vld [vmem:[%s1316 + $0x2f8] sm:$0xf]
  %v1508 = vld [vmem:[%s1316 + $0x2fc] sm:$0xf]
  %v1509 = vld [vmem:[%s1316 + $0x300] sm:$0xf]
  %v1510 = vld [vmem:[%s1316 + $0x304] sm:$0xf]
  %v1511 = vld [vmem:[%s1316 + $0x308] sm:$0xf]
  %v1512 = vld [vmem:[%s1316 + $0x30c] sm:$0xf]
  %v1513 = vld [vmem:[%s1316 + $0x310] sm:$0xf]
  %v1514 = vld [vmem:[%s1316 + $0x314] sm:$0xf]
  %v1515 = vld [vmem:[%s1316 + $0x318] sm:$0xf]
  %v1516 = vld [vmem:[%s1316 + $0x31c] sm:$0xf]
  %v1517 = vld [vmem:[%s1316 + $0x320] sm:$0xf]
  %v1518 = vld [vmem:[%s1316 + $0x324] sm:$0xf]
  %v1519 = vld [vmem:[%s1316 + $0x328] sm:$0xf]
  %v1520 = vld [vmem:[%s1316 + $0x32c] sm:$0xf]
  %v1521 = vld [vmem:[%s1316 + $0x330] sm:$0xf]
  %v1522 = vld [vmem:[%s1316 + $0x334] sm:$0xf]
  %v1523 = vld [vmem:[%s1316 + $0x338] sm:$0xf]
  %v1524 = vld [vmem:[%s1316 + $0x33c] sm:$0xf]
  %v1525 = vld [vmem:[%s1316 + $0x340] sm:$0xf]
  %v1526 = vld [vmem:[%s1316 + $0x344] sm:$0xf]
  %v1527 = vld [vmem:[%s1316 + $0x348] sm:$0xf]
  %v1528 = vld [vmem:[%s1316 + $0x34c] sm:$0xf]
  %v1529 = vld [vmem:[%s1316 + $0x350] sm:$0xf]
  %v1530 = vld [vmem:[%s1316 + $0x354] sm:$0xf]
  %v1531 = vld [vmem:[%s1316 + $0x358] sm:$0xf]
  %v1532 = vld [vmem:[%s1316 + $0x35c] sm:$0xf]
  %v1533 = vld [vmem:[%s1316 + $0x360] sm:$0xf]
  %v1534 = vld [vmem:[%s1316 + $0x364] sm:$0xf]
  %v1535 = vld [vmem:[%s1316 + $0x368] sm:$0xf]
  %v1536 = vld [vmem:[%s1316 + $0x36c] sm:$0xf]
  %v1537 = vld [vmem:[%s1316 + $0x370] sm:$0xf]
  %v1538 = vld [vmem:[%s1316 + $0x374] sm:$0xf]
  %v1539 = vld [vmem:[%s1316 + $0x378] sm:$0xf]
  %v1540 = vld [vmem:[%s1316 + $0x37c] sm:$0xf]
  %v1541 = vld [vmem:[%s1316 + $0x380] sm:$0xf]
  %v1542 = vld [vmem:[%s1316 + $0x384] sm:$0xf]
  %v1543 = vld [vmem:[%s1316 + $0x388] sm:$0xf]
  %v1544 = vld [vmem:[%s1316 + $0x38c] sm:$0xf]
  %v1545 = vld [vmem:[%s1316 + $0x390] sm:$0xf]
  %v1546 = vld [vmem:[%s1316 + $0x394] sm:$0xf]
  %v1547 = vld [vmem:[%s1316 + $0x398] sm:$0xf]
  %v1548 = vld [vmem:[%s1316 + $0x39c] sm:$0xf]
  %v1549 = vld [vmem:[%s1316 + $0x3a0] sm:$0xf]
  %v1550 = vld [vmem:[%s1316 + $0x3a4] sm:$0xf]
  %v1551 = vld [vmem:[%s1316 + $0x3a8] sm:$0xf]
  %v1552 = vld [vmem:[%s1316 + $0x3ac] sm:$0xf]
  %v1553 = vld [vmem:[%s1316 + $0x3b0] sm:$0xf]
  %v1554 = vld [vmem:[%s1316 + $0x3b4] sm:$0xf]
  %v1555 = vld [vmem:[%s1316 + $0x3b8] sm:$0xf]
  %v1556 = vld [vmem:[%s1316 + $0x3bc] sm:$0xf]
  %v1557 = vld [vmem:[%s1316 + $0x3c0] sm:$0xf]
  %v1558 = vld [vmem:[%s1316 + $0x3c4] sm:$0xf]
  %v1559 = vld [vmem:[%s1316 + $0x3c8] sm:$0xf]
  %v1560 = vld [vmem:[%s1316 + $0x3cc] sm:$0xf]
  %v1561 = vld [vmem:[%s1316 + $0x3d0] sm:$0xf]
  %v1562 = vld [vmem:[%s1316 + $0x3d4] sm:$0xf]
  %v1563 = vld [vmem:[%s1316 + $0x3d8] sm:$0xf]
  %v1564 = vld [vmem:[%s1316 + $0x3dc] sm:$0xf]
  %v1565 = vld [vmem:[%s1316 + $0x3e0] sm:$0xf]
  %v1566 = vld [vmem:[%s1316 + $0x3e4] sm:$0xf]
  %v1567 = vld [vmem:[%s1316 + $0x3e8] sm:$0xf]
  %v1568 = vld [vmem:[%s1316 + $0x3ec] sm:$0xf]
  %v1569 = vld [vmem:[%s1316 + $0x3f0] sm:$0xf]
  %v1570 = vld [vmem:[%s1316 + $0x3f4] sm:$0xf]
  %v1571 = vld [vmem:[%s1316 + $0x3f8] sm:$0xf]
  %v1572 = vld [vmem:[%s1316 + $0x3fc] sm:$0xf]
  %v1829 = vunpack.c.l.b16 %v1317
  %v1830 = vunpack.c.l.b16 %v1318
  %v1831 = vunpack.c.l.b16 %v1319
  %v1832 = vunpack.c.l.b16 %v1320
  %v1833 = vunpack.c.l.b16 %v1321
  %v1834 = vunpack.c.l.b16 %v1322
  %v1835 = vunpack.c.l.b16 %v1323
  %v1836 = vunpack.c.l.b16 %v1324
  %v1837 = vunpack.c.l.b16 %v1325
  %v1838 = vunpack.c.l.b16 %v1326
  %v1839 = vunpack.c.l.b16 %v1327
  %v1840 = vunpack.c.l.b16 %v1328
  %v1841 = vunpack.c.l.b16 %v1329
  %v1842 = vunpack.c.l.b16 %v1330
  %v1843 = vunpack.c.l.b16 %v1331
  %v1844 = vunpack.c.l.b16 %v1332
  %v1845 = vunpack.c.l.b16 %v1333
  %v1846 = vunpack.c.l.b16 %v1334
  %v1847 = vunpack.c.l.b16 %v1335
  %v1848 = vunpack.c.l.b16 %v1336
  %v1849 = vunpack.c.l.b16 %v1337
  %v1850 = vunpack.c.l.b16 %v1338
  %v1851 = vunpack.c.l.b16 %v1339
  %v1852 = vunpack.c.l.b16 %v1340
  %v1853 = vunpack.c.l.b16 %v1341
  %v1854 = vunpack.c.l.b16 %v1342
  %v1855 = vunpack.c.l.b16 %v1343
  %v1856 = vunpack.c.l.b16 %v1344
  %v1857 = vunpack.c.l.b16 %v1345
  %v1858 = vunpack.c.l.b16 %v1346
  %v1859 = vunpack.c.l.b16 %v1347
  %v1860 = vunpack.c.l.b16 %v1348
  %v1861 = vunpack.c.l.b16 %v1349
  %v1862 = vunpack.c.l.b16 %v1350
  %v1863 = vunpack.c.l.b16 %v1351
  %v1864 = vunpack.c.l.b16 %v1352
  %v1865 = vunpack.c.l.b16 %v1353
  %v1866 = vunpack.c.l.b16 %v1354
  %v1867 = vunpack.c.l.b16 %v1355
  %v1868 = vunpack.c.l.b16 %v1356
  %v1869 = vunpack.c.l.b16 %v1357
  %v1870 = vunpack.c.l.b16 %v1358
  %v1871 = vunpack.c.l.b16 %v1359
  %v1872 = vunpack.c.l.b16 %v1360
  %v1873 = vunpack.c.l.b16 %v1361
  %v1874 = vunpack.c.l.b16 %v1362
  %v1875 = vunpack.c.l.b16 %v1363
  %v1876 = vunpack.c.l.b16 %v1364
  %v1877 = vunpack.c.l.b16 %v1365
  %v1878 = vunpack.c.l.b16 %v1366
  %v1879 = vunpack.c.l.b16 %v1367
  %v1880 = vunpack.c.l.b16 %v1368
  %v1881 = vunpack.c.l.b16 %v1369
  %v1882 = vunpack.c.l.b16 %v1370
  %v1883 = vunpack.c.l.b16 %v1371
  %v1884 = vunpack.c.l.b16 %v1372
  %v1885 = vunpack.c.l.b16 %v1373
  %v1886 = vunpack.c.l.b16 %v1374
  %v1887 = vunpack.c.l.b16 %v1375
  %v1888 = vunpack.c.l.b16 %v1376
  %v1889 = vunpack.c.l.b16 %v1377
  %v1890 = vunpack.c.l.b16 %v1378
  %v1891 = vunpack.c.l.b16 %v1379
  %v1892 = vunpack.c.l.b16 %v1380
  %v1893 = vunpack.c.l.b16 %v1381
  %v1894 = vunpack.c.l.b16 %v1382
  %v1895 = vunpack.c.l.b16 %v1383
  %v1896 = vunpack.c.l.b16 %v1384
  %v1897 = vunpack.c.l.b16 %v1385
  %v1898 = vunpack.c.l.b16 %v1386
  %v1899 = vunpack.c.l.b16 %v1387
  %v1900 = vunpack.c.l.b16 %v1388
  %v1901 = vunpack.c.l.b16 %v1389
  %v1902 = vunpack.c.l.b16 %v1390
  %v1903 = vunpack.c.l.b16 %v1391
  %v1904 = vunpack.c.l.b16 %v1392
  %v1905 = vunpack.c.l.b16 %v1393
  %v1906 = vunpack.c.l.b16 %v1394
  %v1907 = vunpack.c.l.b16 %v1395
  %v1908 = vunpack.c.l.b16 %v1396
  %v1909 = vunpack.c.l.b16 %v1397
  %v1910 = vunpack.c.l.b16 %v1398
  %v1911 = vunpack.c.l.b16 %v1399
  %v1912 = vunpack.c.l.b16 %v1400
  %v1913 = vunpack.c.l.b16 %v1401
  %v1914 = vunpack.c.l.b16 %v1402
  %v1915 = vunpack.c.l.b16 %v1403
  %v1916 = vunpack.c.l.b16 %v1404
  %v1917 = vunpack.c.l.b16 %v1405
  %v1918 = vunpack.c.l.b16 %v1406
  %v1919 = vunpack.c.l.b16 %v1407
  %v1920 = vunpack.c.l.b16 %v1408
  %v1921 = vunpack.c.l.b16 %v1409
  %v1922 = vunpack.c.l.b16 %v1410
  %v1923 = vunpack.c.l.b16 %v1411
  %v1924 = vunpack.c.l.b16 %v1412
  %v1925 = vunpack.c.l.b16 %v1413
  %v1926 = vunpack.c.l.b16 %v1414
  %v1927 = vunpack.c.l.b16 %v1415
  %v1928 = vunpack.c.l.b16 %v1416
  %v1929 = vunpack.c.l.b16 %v1417
  %v1930 = vunpack.c.l.b16 %v1418
  %v1931 = vunpack.c.l.b16 %v1419
  %v1932 = vunpack.c.l.b16 %v1420
  %v1933 = vunpack.c.l.b16 %v1421
  %v1934 = vunpack.c.l.b16 %v1422
  %v1935 = vunpack.c.l.b16 %v1423
  %v1936 = vunpack.c.l.b16 %v1424
  %v1937 = vunpack.c.l.b16 %v1425
  %v1938 = vunpack.c.l.b16 %v1426
  %v1939 = vunpack.c.l.b16 %v1427
  %v1940 = vunpack.c.l.b16 %v1428
  %v1941 = vunpack.c.l.b16 %v1429
  %v1942 = vunpack.c.l.b16 %v1430
  %v1943 = vunpack.c.l.b16 %v1431
  %v1944 = vunpack.c.l.b16 %v1432
  %v1945 = vunpack.c.l.b16 %v1433
  %v1946 = vunpack.c.l.b16 %v1434
  %v1947 = vunpack.c.l.b16 %v1435
  %v1948 = vunpack.c.l.b16 %v1436
  %v1949 = vunpack.c.l.b16 %v1437
  %v1950 = vunpack.c.l.b16 %v1438
  %v1951 = vunpack.c.l.b16 %v1439
  %v1952 = vunpack.c.l.b16 %v1440
  %v1953 = vunpack.c.l.b16 %v1441
  %v1954 = vunpack.c.l.b16 %v1442
  %v1955 = vunpack.c.l.b16 %v1443
  %v1956 = vunpack.c.l.b16 %v1444
  %v1957 = vunpack.c.l.b16 %v1445
  %v1958 = vunpack.c.l.b16 %v1446
  %v1959 = vunpack.c.l.b16 %v1447
  %v1960 = vunpack.c.l.b16 %v1448
  %v1961 = vunpack.c.l.b16 %v1449
  %v1962 = vunpack.c.l.b16 %v1450
  %v1963 = vunpack.c.l.b16 %v1451
  %v1964 = vunpack.c.l.b16 %v1452
  %v1965 = vunpack.c.l.b16 %v1453
  %v1966 = vunpack.c.l.b16 %v1454
  %v1967 = vunpack.c.l.b16 %v1455
  %v1968 = vunpack.c.l.b16 %v1456
  %v1969 = vunpack.c.l.b16 %v1457
  %v1970 = vunpack.c.l.b16 %v1458
  %v1971 = vunpack.c.l.b16 %v1459
  %v1972 = vunpack.c.l.b16 %v1460
  %v1973 = vunpack.c.l.b16 %v1461
  %v1974 = vunpack.c.l.b16 %v1462
  %v1975 = vunpack.c.l.b16 %v1463
  %v1976 = vunpack.c.l.b16 %v1464
  %v1977 = vunpack.c.l.b16 %v1465
  %v1978 = vunpack.c.l.b16 %v1466
  %v1979 = vunpack.c.l.b16 %v1467
  %v1980 = vunpack.c.l.b16 %v1468
  %v1981 = vunpack.c.l.b16 %v1469
  %v1982 = vunpack.c.l.b16 %v1470
  %v1983 = vunpack.c.l.b16 %v1471
  %v1984 = vunpack.c.l.b16 %v1472
  %v1985 = vunpack.c.l.b16 %v1473
  %v1986 = vunpack.c.l.b16 %v1474
  %v1987 = vunpack.c.l.b16 %v1475
  %v1988 = vunpack.c.l.b16 %v1476
  %v1989 = vunpack.c.l.b16 %v1477
  %v1990 = vunpack.c.l.b16 %v1478
  %v1991 = vunpack.c.l.b16 %v1479
  %v1992 = vunpack.c.l.b16 %v1480
  %v1993 = vunpack.c.l.b16 %v1481
  %v1994 = vunpack.c.l.b16 %v1482
  %v1995 = vunpack.c.l.b16 %v1483
  %v1996 = vunpack.c.l.b16 %v1484
  %v1997 = vunpack.c.l.b16 %v1485
  %v1998 = vunpack.c.l.b16 %v1486
  %v1999 = vunpack.c.l.b16 %v1487
  %v2000 = vunpack.c.l.b16 %v1488
  %v2001 = vunpack.c.l.b16 %v1489
  %v2002 = vunpack.c.l.b16 %v1490
  %v2003 = vunpack.c.l.b16 %v1491
  %v2004 = vunpack.c.l.b16 %v1492
  %v2005 = vunpack.c.l.b16 %v1493
  %v2006 = vunpack.c.l.b16 %v1494
  %v2007 = vunpack.c.l.b16 %v1495
  %v2008 = vunpack.c.l.b16 %v1496
  %v2009 = vunpack.c.l.b16 %v1497
  %v2010 = vunpack.c.l.b16 %v1498
  %v2011 = vunpack.c.l.b16 %v1499
  %v2012 = vunpack.c.l.b16 %v1500
  %v2013 = vunpack.c.l.b16 %v1501
  %v2014 = vunpack.c.l.b16 %v1502
  %v2015 = vunpack.c.l.b16 %v1503
  %v2016 = vunpack.c.l.b16 %v1504
  %v2017 = vunpack.c.l.b16 %v1505
  %v2018 = vunpack.c.l.b16 %v1506
  %v2019 = vunpack.c.l.b16 %v1507
  %v2020 = vunpack.c.l.b16 %v1508
  %v2021 = vunpack.c.l.b16 %v1509
  %v2022 = vunpack.c.l.b16 %v1510
  %v2023 = vunpack.c.l.b16 %v1511
  %v2024 = vunpack.c.l.b16 %v1512
  %v2025 = vunpack.c.l.b16 %v1513
  %v2026 = vunpack.c.l.b16 %v1514
  %v2027 = vunpack.c.l.b16 %v1515
  %v2028 = vunpack.c.l.b16 %v1516
  %v2029 = vunpack.c.l.b16 %v1517
  %v2030 = vunpack.c.l.b16 %v1518
  %v2031 = vunpack.c.l.b16 %v1519
  %v2032 = vunpack.c.l.b16 %v1520
  %v2033 = vunpack.c.l.b16 %v1521
  %v2034 = vunpack.c.l.b16 %v1522
  %v2035 = vunpack.c.l.b16 %v1523
  %v2036 = vunpack.c.l.b16 %v1524
  %v2037 = vunpack.c.l.b16 %v1525
  %v2038 = vunpack.c.l.b16 %v1526
  %v2039 = vunpack.c.l.b16 %v1527
  %v2040 = vunpack.c.l.b16 %v1528
  %v2041 = vunpack.c.l.b16 %v1529
  %v2042 = vunpack.c.l.b16 %v1530
  %v2043 = vunpack.c.l.b16 %v1531
  %v2044 = vunpack.c.l.b16 %v1532
  %v2045 = vunpack.c.l.b16 %v1533
  %v2046 = vunpack.c.l.b16 %v1534
  %v2047 = vunpack.c.l.b16 %v1535
  %v2048 = vunpack.c.l.b16 %v1536
  %v2049 = vunpack.c.l.b16 %v1537
  %v2050 = vunpack.c.l.b16 %v1538
  %v2051 = vunpack.c.l.b16 %v1539
  %v2052 = vunpack.c.l.b16 %v1540
  %v2053 = vunpack.c.l.b16 %v1541
  %v2054 = vunpack.c.l.b16 %v1542
  %v2055 = vunpack.c.l.b16 %v1543
  %v2056 = vunpack.c.l.b16 %v1544
  %v2057 = vunpack.c.l.b16 %v1545
  %v2058 = vunpack.c.l.b16 %v1546
  %v2059 = vunpack.c.l.b16 %v1547
  %v2060 = vunpack.c.l.b16 %v1548
  %v2061 = vunpack.c.l.b16 %v1549
  %v2062 = vunpack.c.l.b16 %v1550
  %v2063 = vunpack.c.l.b16 %v1551
  %v2064 = vunpack.c.l.b16 %v1552
  %v2065 = vunpack.c.l.b16 %v1553
  %v2066 = vunpack.c.l.b16 %v1554
  %v2067 = vunpack.c.l.b16 %v1555
  %v2068 = vunpack.c.l.b16 %v1556
  %v2069 = vunpack.c.l.b16 %v1557
  %v2070 = vunpack.c.l.b16 %v1558
  %v2071 = vunpack.c.l.b16 %v1559
  %v2072 = vunpack.c.l.b16 %v1560
  %v2073 = vunpack.c.l.b16 %v1561
  %v2074 = vunpack.c.l.b16 %v1562
  %v2075 = vunpack.c.l.b16 %v1563
  %v2076 = vunpack.c.l.b16 %v1564
  %v2077 = vunpack.c.l.b16 %v1565
  %v2078 = vunpack.c.l.b16 %v1566
  %v2079 = vunpack.c.l.b16 %v1567
  %v2080 = vunpack.c.l.b16 %v1568
  %v2081 = vunpack.c.l.b16 %v1569
  %v2082 = vunpack.c.l.b16 %v1570
  %v2083 = vunpack.c.l.b16 %v1571
  %v2084 = vunpack.c.l.b16 %v1572
  %v2085 = vpack.c.b16 %v1830, %v1829
  %v2086 = vpack.c.b16 %v1832, %v1831
  %v2087 = vpack.c.b16 %v1834, %v1833
  %v2088 = vpack.c.b16 %v1836, %v1835
  %v2089 = vpack.c.b16 %v1838, %v1837
  %v2090 = vpack.c.b16 %v1840, %v1839
  %v2091 = vpack.c.b16 %v1842, %v1841
  %v2092 = vpack.c.b16 %v1844, %v1843
  %v2093 = vpack.c.b16 %v1846, %v1845
  %v2094 = vpack.c.b16 %v1848, %v1847
  %v2095 = vpack.c.b16 %v1850, %v1849
  %v2096 = vpack.c.b16 %v1852, %v1851
  %v2097 = vpack.c.b16 %v1854, %v1853
  %v2098 = vpack.c.b16 %v1856, %v1855
  %v2099 = vpack.c.b16 %v1858, %v1857
  %v2100 = vpack.c.b16 %v1860, %v1859
  %v2101 = vpack.c.b16 %v1862, %v1861
  %v2102 = vpack.c.b16 %v1864, %v1863
  %v2103 = vpack.c.b16 %v1866, %v1865
  %v2104 = vpack.c.b16 %v1868, %v1867
  %v2105 = vpack.c.b16 %v1870, %v1869
  %v2106 = vpack.c.b16 %v1872, %v1871
  %v2107 = vpack.c.b16 %v1874, %v1873
  %v2108 = vpack.c.b16 %v1876, %v1875
  %v2109 = vpack.c.b16 %v1878, %v1877
  %v2110 = vpack.c.b16 %v1880, %v1879
  %v2111 = vpack.c.b16 %v1882, %v1881
  %v2112 = vpack.c.b16 %v1884, %v1883
  %v2113 = vpack.c.b16 %v1886, %v1885
  %v2114 = vpack.c.b16 %v1888, %v1887
  %v2115 = vpack.c.b16 %v1890, %v1889
  %v2116 = vpack.c.b16 %v1892, %v1891
  %v2117 = vpack.c.b16 %v1894, %v1893
  %v2118 = vpack.c.b16 %v1896, %v1895
  %v2119 = vpack.c.b16 %v1898, %v1897
  %v2120 = vpack.c.b16 %v1900, %v1899
  %v2121 = vpack.c.b16 %v1902, %v1901
  %v2122 = vpack.c.b16 %v1904, %v1903
  %v2123 = vpack.c.b16 %v1906, %v1905
  %v2124 = vpack.c.b16 %v1908, %v1907
  %v2125 = vpack.c.b16 %v1910, %v1909
  %v2126 = vpack.c.b16 %v1912, %v1911
  %v2127 = vpack.c.b16 %v1914, %v1913
  %v2128 = vpack.c.b16 %v1916, %v1915
  %v2129 = vpack.c.b16 %v1918, %v1917
  %v2130 = vpack.c.b16 %v1920, %v1919
  %v2131 = vpack.c.b16 %v1922, %v1921
  %v2132 = vpack.c.b16 %v1924, %v1923
  %v2133 = vpack.c.b16 %v1926, %v1925
  %v2134 = vpack.c.b16 %v1928, %v1927
  %v2135 = vpack.c.b16 %v1930, %v1929
  %v2136 = vpack.c.b16 %v1932, %v1931
  %v2137 = vpack.c.b16 %v1934, %v1933
  %v2138 = vpack.c.b16 %v1936, %v1935
  %v2139 = vpack.c.b16 %v1938, %v1937
  %v2140 = vpack.c.b16 %v1940, %v1939
  %v2141 = vpack.c.b16 %v1942, %v1941
  %v2142 = vpack.c.b16 %v1944, %v1943
  %v2143 = vpack.c.b16 %v1946, %v1945
  %v2144 = vpack.c.b16 %v1948, %v1947
  %v2145 = vpack.c.b16 %v1950, %v1949
  %v2146 = vpack.c.b16 %v1952, %v1951
  %v2147 = vpack.c.b16 %v1954, %v1953
  %v2148 = vpack.c.b16 %v1956, %v1955
  %v2149 = vpack.c.b16 %v1958, %v1957
  %v2150 = vpack.c.b16 %v1960, %v1959
  %v2151 = vpack.c.b16 %v1962, %v1961
  %v2152 = vpack.c.b16 %v1964, %v1963
  %v2153 = vpack.c.b16 %v1966, %v1965
  %v2154 = vpack.c.b16 %v1968, %v1967
  %v2155 = vpack.c.b16 %v1970, %v1969
  %v2156 = vpack.c.b16 %v1972, %v1971
  %v2157 = vpack.c.b16 %v1974, %v1973
  %v2158 = vpack.c.b16 %v1976, %v1975
  %v2159 = vpack.c.b16 %v1978, %v1977
  %v2160 = vpack.c.b16 %v1980, %v1979
  %v2161 = vpack.c.b16 %v1982, %v1981
  %v2162 = vpack.c.b16 %v1984, %v1983
  %v2163 = vpack.c.b16 %v1986, %v1985
  %v2164 = vpack.c.b16 %v1988, %v1987
  %v2165 = vpack.c.b16 %v1990, %v1989
  %v2166 = vpack.c.b16 %v1992, %v1991
  %v2167 = vpack.c.b16 %v1994, %v1993
  %v2168 = vpack.c.b16 %v1996, %v1995
  %v2169 = vpack.c.b16 %v1998, %v1997
  %v2170 = vpack.c.b16 %v2000, %v1999
  %v2171 = vpack.c.b16 %v2002, %v2001
  %v2172 = vpack.c.b16 %v2004, %v2003
  %v2173 = vpack.c.b16 %v2006, %v2005
  %v2174 = vpack.c.b16 %v2008, %v2007
  %v2175 = vpack.c.b16 %v2010, %v2009
  %v2176 = vpack.c.b16 %v2012, %v2011
  %v2177 = vpack.c.b16 %v2014, %v2013
  %v2178 = vpack.c.b16 %v2016, %v2015
  %v2179 = vpack.c.b16 %v2018, %v2017
  %v2180 = vpack.c.b16 %v2020, %v2019
  %v2181 = vpack.c.b16 %v2022, %v2021
  %v2182 = vpack.c.b16 %v2024, %v2023
  %v2183 = vpack.c.b16 %v2026, %v2025
  %v2184 = vpack.c.b16 %v2028, %v2027
  %v2185 = vpack.c.b16 %v2030, %v2029
  %v2186 = vpack.c.b16 %v2032, %v2031
  %v2187 = vpack.c.b16 %v2034, %v2033
  %v2188 = vpack.c.b16 %v2036, %v2035
  %v2189 = vpack.c.b16 %v2038, %v2037
  %v2190 = vpack.c.b16 %v2040, %v2039
  %v2191 = vpack.c.b16 %v2042, %v2041
  %v2192 = vpack.c.b16 %v2044, %v2043
  %v2193 = vpack.c.b16 %v2046, %v2045
  %v2194 = vpack.c.b16 %v2048, %v2047
  %v2195 = vpack.c.b16 %v2050, %v2049
  %v2196 = vpack.c.b16 %v2052, %v2051
  %v2197 = vpack.c.b16 %v2054, %v2053
  %v2198 = vpack.c.b16 %v2056, %v2055
  %v2199 = vpack.c.b16 %v2058, %v2057
  %v2200 = vpack.c.b16 %v2060, %v2059
  %v2201 = vpack.c.b16 %v2062, %v2061
  %v2202 = vpack.c.b16 %v2064, %v2063
  %v2203 = vpack.c.b16 %v2066, %v2065
  %v2204 = vpack.c.b16 %v2068, %v2067
  %v2205 = vpack.c.b16 %v2070, %v2069
  %v2206 = vpack.c.b16 %v2072, %v2071
  %v2207 = vpack.c.b16 %v2074, %v2073
  %v2208 = vpack.c.b16 %v2076, %v2075
  %v2209 = vpack.c.b16 %v2078, %v2077
  %v2210 = vpack.c.b16 %v2080, %v2079
  %v2211 = vpack.c.b16 %v2082, %v2081
  %v2212 = vpack.c.b16 %v2084, %v2083
  %2341 = vmatpush.bf16.msra.mxu0 %v2092
  %2342 = vmatpush.bf16.msra.mxu0 %v2091
  %2343 = vmatpush.bf16.msra.mxu0 %v2090
  %2344 = vmatpush.bf16.msra.mxu0 %v2089
  %2345 = vmatpush.bf16.msra.mxu0 %v2088
  %2346 = vmatpush.bf16.msra.mxu0 %v2087
  %2347 = vmatpush.bf16.msra.mxu0 %v2086
  %2348 = vmatpush.bf16.msra.mxu0 %v2085
  %2349 = vmatmul.bf16.gmra.mxu0 %v305
  %v2350 = vpop.f32.mrf.mxu0
  %v2351 = vadd.f32 0.0, %v2350
  %v2352 = vpop.f32.mrf.mxu0
  %2353 = vdwg.mxu0
  %2354 = vmatpush.bf16.msra.mxu0 %v2100
  %2355 = vmatpush.bf16.msra.mxu0 %v2099
  %2356 = vmatpush.bf16.msra.mxu0 %v2098
  %2357 = vmatpush.bf16.msra.mxu0 %v2097
  %2358 = vmatpush.bf16.msra.mxu0 %v2096
  %2359 = vmatpush.bf16.msra.mxu0 %v2095
  %2360 = vmatpush.bf16.msra.mxu0 %v2094
  %2361 = vmatpush.bf16.msra.mxu0 %v2093
  %2362 = vmatmul.bf16.gmra.mxu0 %v306
  %v2363 = vpop.f32.mrf.mxu0
  %v2364 = vadd.f32 %v2351, %v2363
  %v2365 = vpop.f32.mrf.mxu0
  %2366 = vdwg.mxu0
  %2367 = vmatpush.bf16.msra.mxu0 %v2108
  %2368 = vmatpush.bf16.msra.mxu0 %v2107
  %2369 = vmatpush.bf16.msra.mxu0 %v2106
  %2370 = vmatpush.bf16.msra.mxu0 %v2105
  %2371 = vmatpush.bf16.msra.mxu0 %v2104
  %2372 = vmatpush.bf16.msra.mxu0 %v2103
  %2373 = vmatpush.bf16.msra.mxu0 %v2102
  %2374 = vmatpush.bf16.msra.mxu0 %v2101
  %2375 = vmatmul.bf16.gmra.mxu0 %v307
  %v2376 = vpop.f32.mrf.mxu0
  %v2377 = vadd.f32 %v2364, %v2376
  %v2378 = vpop.f32.mrf.mxu0
  %2379 = vdwg.mxu0
  %2380 = vmatpush.bf16.msra.mxu0 %v2116
  %2381 = vmatpush.bf16.msra.mxu0 %v2115
  %2382 = vmatpush.bf16.msra.mxu0 %v2114
  %2383 = vmatpush.bf16.msra.mxu0 %v2113
  %2384 = vmatpush.bf16.msra.mxu0 %v2112
  %2385 = vmatpush.bf16.msra.mxu0 %v2111
  %2386 = vmatpush.bf16.msra.mxu0 %v2110
  %2387 = vmatpush.bf16.msra.mxu0 %v2109
  %2388 = vmatmul.bf16.gmra.mxu0 %v308
  %v2389 = vpop.f32.mrf.mxu0
  %v2390 = vadd.f32 %v2377, %v2389
  %v2391 = vpop.f32.mrf.mxu0
  %2392 = vdwg.mxu0
  %2393 = vmatpush.bf16.msra.mxu0 %v2124
  %2394 = vmatpush.bf16.msra.mxu0 %v2123
  %2395 = vmatpush.bf16.msra.mxu0 %v2122
  %2396 = vmatpush.bf16.msra.mxu0 %v2121
  %2397 = vmatpush.bf16.msra.mxu0 %v2120
  %2398 = vmatpush.bf16.msra.mxu0 %v2119
  %2399 = vmatpush.bf16.msra.mxu0 %v2118
  %2400 = vmatpush.bf16.msra.mxu0 %v2117
  %2401 = vmatmul.bf16.gmra.mxu0 %v309
  %v2402 = vpop.f32.mrf.mxu0
  %v2403 = vadd.f32 %v2390, %v2402
  %v2404 = vpop.f32.mrf.mxu0
  %2405 = vdwg.mxu0
  %2406 = vmatpush.bf16.msra.mxu0 %v2132
  %2407 = vmatpush.bf16.msra.mxu0 %v2131
  %2408 = vmatpush.bf16.msra.mxu0 %v2130
  %2409 = vmatpush.bf16.msra.mxu0 %v2129
  %2410 = vmatpush.bf16.msra.mxu0 %v2128
  %2411 = vmatpush.bf16.msra.mxu0 %v2127
  %2412 = vmatpush.bf16.msra.mxu0 %v2126
  %2413 = vmatpush.bf16.msra.mxu0 %v2125
  %2414 = vmatmul.bf16.gmra.mxu0 %v310
  %v2415 = vpop.f32.mrf.mxu0
  %v2416 = vadd.f32 %v2403, %v2415
  %v2417 = vpop.f32.mrf.mxu0
  %2418 = vdwg.mxu0
  %2419 = vmatpush.bf16.msra.mxu0 %v2140
  %2420 = vmatpush.bf16.msra.mxu0 %v2139
  %2421 = vmatpush.bf16.msra.mxu0 %v2138
  %2422 = vmatpush.bf16.msra.mxu0 %v2137
  %2423 = vmatpush.bf16.msra.mxu0 %v2136
  %2424 = vmatpush.bf16.msra.mxu0 %v2135
  %2425 = vmatpush.bf16.msra.mxu0 %v2134
  %2426 = vmatpush.bf16.msra.mxu0 %v2133
  %2427 = vmatmul.bf16.gmra.mxu0 %v311
  %v2428 = vpop.f32.mrf.mxu0
  %v2429 = vadd.f32 %v2416, %v2428
  %v2430 = vpop.f32.mrf.mxu0
  %2431 = vdwg.mxu0
  %2432 = vmatpush.bf16.msra.mxu0 %v2148
  %2433 = vmatpush.bf16.msra.mxu0 %v2147
  %2434 = vmatpush.bf16.msra.mxu0 %v2146
  %2435 = vmatpush.bf16.msra.mxu0 %v2145
  %2436 = vmatpush.bf16.msra.mxu0 %v2144
  %2437 = vmatpush.bf16.msra.mxu0 %v2143
  %2438 = vmatpush.bf16.msra.mxu0 %v2142
  %2439 = vmatpush.bf16.msra.mxu0 %v2141
  %2440 = vmatmul.bf16.gmra.mxu0 %v312
  %v2441 = vpop.f32.mrf.mxu0
  %v2442 = vadd.f32 %v2429, %v2441
  %v2443 = vpop.f32.mrf.mxu0
  %2444 = vdwg.mxu0
  %2445 = vmatpush.bf16.msra.mxu0 %v2156
  %2446 = vmatpush.bf16.msra.mxu0 %v2155
  %2447 = vmatpush.bf16.msra.mxu0 %v2154
  %2448 = vmatpush.bf16.msra.mxu0 %v2153
  %2449 = vmatpush.bf16.msra.mxu0 %v2152
  %2450 = vmatpush.bf16.msra.mxu0 %v2151
  %2451 = vmatpush.bf16.msra.mxu0 %v2150
  %2452 = vmatpush.bf16.msra.mxu0 %v2149
  %2453 = vmatmul.bf16.gmra.mxu0 %v313
  %v2454 = vpop.f32.mrf.mxu0
  %v2455 = vadd.f32 %v2442, %v2454
  %v2456 = vpop.f32.mrf.mxu0
  %2457 = vdwg.mxu0
  %2458 = vmatpush.bf16.msra.mxu0 %v2164
  %2459 = vmatpush.bf16.msra.mxu0 %v2163
  %2460 = vmatpush.bf16.msra.mxu0 %v2162
  %2461 = vmatpush.bf16.msra.mxu0 %v2161
  %2462 = vmatpush.bf16.msra.mxu0 %v2160
  %2463 = vmatpush.bf16.msra.mxu0 %v2159
  %2464 = vmatpush.bf16.msra.mxu0 %v2158
  %2465 = vmatpush.bf16.msra.mxu0 %v2157
  %2466 = vmatmul.bf16.gmra.mxu0 %v314
  %v2467 = vpop.f32.mrf.mxu0
  %v2468 = vadd.f32 %v2455, %v2467
  %v2469 = vpop.f32.mrf.mxu0
  %2470 = vdwg.mxu0
  %2471 = vmatpush.bf16.msra.mxu0 %v2172
  %2472 = vmatpush.bf16.msra.mxu0 %v2171
  %2473 = vmatpush.bf16.msra.mxu0 %v2170
  %2474 = vmatpush.bf16.msra.mxu0 %v2169
  %2475 = vmatpush.bf16.msra.mxu0 %v2168
  %2476 = vmatpush.bf16.msra.mxu0 %v2167
  %2477 = vmatpush.bf16.msra.mxu0 %v2166
  %2478 = vmatpush.bf16.msra.mxu0 %v2165
  %2479 = vmatmul.bf16.gmra.mxu0 %v315
  %v2480 = vpop.f32.mrf.mxu0
  %v2481 = vadd.f32 %v2468, %v2480
  %v2482 = vpop.f32.mrf.mxu0
  %2483 = vdwg.mxu0
  %2484 = vmatpush.bf16.msra.mxu0 %v2180
  %2485 = vmatpush.bf16.msra.mxu0 %v2179
  %2486 = vmatpush.bf16.msra.mxu0 %v2178
  %2487 = vmatpush.bf16.msra.mxu0 %v2177
  %2488 = vmatpush.bf16.msra.mxu0 %v2176
  %2489 = vmatpush.bf16.msra.mxu0 %v2175
  %2490 = vmatpush.bf16.msra.mxu0 %v2174
  %2491 = vmatpush.bf16.msra.mxu0 %v2173
  %2492 = vmatmul.bf16.gmra.mxu0 %v316
  %v2493 = vpop.f32.mrf.mxu0
  %v2494 = vadd.f32 %v2481, %v2493
  %v2495 = vpop.f32.mrf.mxu0
  %2496 = vdwg.mxu0
  %2497 = vmatpush.bf16.msra.mxu0 %v2188
  %2498 = vmatpush.bf16.msra.mxu0 %v2187
  %2499 = vmatpush.bf16.msra.mxu0 %v2186
  %2500 = vmatpush.bf16.msra.mxu0 %v2185
  %2501 = vmatpush.bf16.msra.mxu0 %v2184
  %2502 = vmatpush.bf16.msra.mxu0 %v2183
  %2503 = vmatpush.bf16.msra.mxu0 %v2182
  %2504 = vmatpush.bf16.msra.mxu0 %v2181
  %2505 = vmatmul.bf16.gmra.mxu0 %v317
  %v2506 = vpop.f32.mrf.mxu0
  %v2507 = vadd.f32 %v2494, %v2506
  %v2508 = vpop.f32.mrf.mxu0
  %2509 = vdwg.mxu0
  %2510 = vmatpush.bf16.msra.mxu0 %v2196
  %2511 = vmatpush.bf16.msra.mxu0 %v2195
  %2512 = vmatpush.bf16.msra.mxu0 %v2194
  %2513 = vmatpush.bf16.msra.mxu0 %v2193
  %2514 = vmatpush.bf16.msra.mxu0 %v2192
  %2515 = vmatpush.bf16.msra.mxu0 %v2191
  %2516 = vmatpush.bf16.msra.mxu0 %v2190
  %2517 = vmatpush.bf16.msra.mxu0 %v2189
  %2518 = vmatmul.bf16.gmra.mxu0 %v318
  %v2519 = vpop.f32.mrf.mxu0
  %v2520 = vadd.f32 %v2507, %v2519
  %v2521 = vpop.f32.mrf.mxu0
  %2522 = vdwg.mxu0
  %2523 = vmatpush.bf16.msra.mxu0 %v2204
  %2524 = vmatpush.bf16.msra.mxu0 %v2203
  %2525 = vmatpush.bf16.msra.mxu0 %v2202
  %2526 = vmatpush.bf16.msra.mxu0 %v2201
  %2527 = vmatpush.bf16.msra.mxu0 %v2200
  %2528 = vmatpush.bf16.msra.mxu0 %v2199
  %2529 = vmatpush.bf16.msra.mxu0 %v2198
  %2530 = vmatpush.bf16.msra.mxu0 %v2197
  %2531 = vmatmul.bf16.gmra.mxu0 %v319
  %v2532 = vpop.f32.mrf.mxu0
  %v2533 = vadd.f32 %v2520, %v2532
  %v2534 = vpop.f32.mrf.mxu0
  %2535 = vdwg.mxu0
  %2536 = vmatpush.bf16.msra.mxu0 %v2212
  %2537 = vmatpush.bf16.msra.mxu0 %v2211
  %2538 = vmatpush.bf16.msra.mxu0 %v2210
  %2539 = vmatpush.bf16.msra.mxu0 %v2209
  %2540 = vmatpush.bf16.msra.mxu0 %v2208
  %2541 = vmatpush.bf16.msra.mxu0 %v2207
  %2542 = vmatpush.bf16.msra.mxu0 %v2206
  %2543 = vmatpush.bf16.msra.mxu0 %v2205
  %2544 = vmatmul.bf16.gmra.mxu0 %v320
  %v2545 = vpop.f32.mrf.mxu0
  %v2546 = vadd.f32 %v2533, %v2545
  %v2547 = vpop.f32.mrf.mxu0
  %2548 = vdwg.mxu0
  %v2549 = vmax.f32 %v2546, 0.0
  %s2550 = scalar_lea.vmem %s3, 8
  %2551 = vst.msk [vmem:[%s2550] sm:$0xff] %vm1314, %v2549
  %v2552 = vld [vmem:[%s16] sm:$0xf]
  %v2553 = vld [vmem:[%s16 + $0x4] sm:$0xf]
  %v2554 = vld [vmem:[%s16 + $0x8] sm:$0xf]
  %v2555 = vld [vmem:[%s16 + $0xc] sm:$0xf]
  %v2556 = vld [vmem:[%s16 + $0x10] sm:$0xf]
  %v2557 = vld [vmem:[%s16 + $0x14] sm:$0xf]
  %v2558 = vld [vmem:[%s16 + $0x18] sm:$0xf]
  %v2559 = vld [vmem:[%s16 + $0x1c] sm:$0xf]
  %v2560 = vld [vmem:[%s16 + $0x20] sm:$0xf]
  %v2561 = vld [vmem:[%s16 + $0x24] sm:$0xf]
  %v2562 = vld [vmem:[%s16 + $0x28] sm:$0xf]
  %v2563 = vld [vmem:[%s16 + $0x2c] sm:$0xf]
  %v2564 = vld [vmem:[%s16 + $0x30] sm:$0xf]
  %v2565 = vld [vmem:[%s16 + $0x34] sm:$0xf]
  %v2566 = vld [vmem:[%s16 + $0x38] sm:$0xf]
  %v2567 = vld [vmem:[%s16 + $0x3c] sm:$0xf]
  %v2568 = vld [vmem:[%s16 + $0x40] sm:$0xf]
  %v2569 = vld [vmem:[%s16 + $0x44] sm:$0xf]
  %v2570 = vld [vmem:[%s16 + $0x48] sm:$0xf]
  %v2571 = vld [vmem:[%s16 + $0x4c] sm:$0xf]
  %v2572 = vld [vmem:[%s16 + $0x50] sm:$0xf]
  %v2573 = vld [vmem:[%s16 + $0x54] sm:$0xf]
  %v2574 = vld [vmem:[%s16 + $0x58] sm:$0xf]
  %v2575 = vld [vmem:[%s16 + $0x5c] sm:$0xf]
  %v2576 = vld [vmem:[%s16 + $0x60] sm:$0xf]
  %v2577 = vld [vmem:[%s16 + $0x64] sm:$0xf]
  %v2578 = vld [vmem:[%s16 + $0x68] sm:$0xf]
  %v2579 = vld [vmem:[%s16 + $0x6c] sm:$0xf]
  %v2580 = vld [vmem:[%s16 + $0x70] sm:$0xf]
  %v2581 = vld [vmem:[%s16 + $0x74] sm:$0xf]
  %v2582 = vld [vmem:[%s16 + $0x78] sm:$0xf]
  %v2583 = vld [vmem:[%s16 + $0x7c] sm:$0xf]
  %v2584 = vld [vmem:[%s16 + $0x80] sm:$0xf]
  %v2585 = vld [vmem:[%s16 + $0x84] sm:$0xf]
  %v2586 = vld [vmem:[%s16 + $0x88] sm:$0xf]
  %v2587 = vld [vmem:[%s16 + $0x8c] sm:$0xf]
  %v2588 = vld [vmem:[%s16 + $0x90] sm:$0xf]
  %v2589 = vld [vmem:[%s16 + $0x94] sm:$0xf]
  %v2590 = vld [vmem:[%s16 + $0x98] sm:$0xf]
  %v2591 = vld [vmem:[%s16 + $0x9c] sm:$0xf]
  %v2592 = vld [vmem:[%s16 + $0xa0] sm:$0xf]
  %v2593 = vld [vmem:[%s16 + $0xa4] sm:$0xf]
  %v2594 = vld [vmem:[%s16 + $0xa8] sm:$0xf]
  %v2595 = vld [vmem:[%s16 + $0xac] sm:$0xf]
  %v2596 = vld [vmem:[%s16 + $0xb0] sm:$0xf]
  %v2597 = vld [vmem:[%s16 + $0xb4] sm:$0xf]
  %v2598 = vld [vmem:[%s16 + $0xb8] sm:$0xf]
  %v2599 = vld [vmem:[%s16 + $0xbc] sm:$0xf]
  %v2600 = vld [vmem:[%s16 + $0xc0] sm:$0xf]
  %v2601 = vld [vmem:[%s16 + $0xc4] sm:$0xf]
  %v2602 = vld [vmem:[%s16 + $0xc8] sm:$0xf]
  %v2603 = vld [vmem:[%s16 + $0xcc] sm:$0xf]
  %v2604 = vld [vmem:[%s16 + $0xd0] sm:$0xf]
  %v2605 = vld [vmem:[%s16 + $0xd4] sm:$0xf]
  %v2606 = vld [vmem:[%s16 + $0xd8] sm:$0xf]
  %v2607 = vld [vmem:[%s16 + $0xdc] sm:$0xf]
  %v2608 = vld [vmem:[%s16 + $0xe0] sm:$0xf]
  %v2609 = vld [vmem:[%s16 + $0xe4] sm:$0xf]
  %v2610 = vld [vmem:[%s16 + $0xe8] sm:$0xf]
  %v2611 = vld [vmem:[%s16 + $0xec] sm:$0xf]
  %v2612 = vld [vmem:[%s16 + $0xf0] sm:$0xf]
  %v2613 = vld [vmem:[%s16 + $0xf4] sm:$0xf]
  %v2614 = vld [vmem:[%s16 + $0xf8] sm:$0xf]
  %v2615 = vld [vmem:[%s16 + $0xfc] sm:$0xf]
  %v2616 = vld [vmem:[%s16 + $0x100] sm:$0xf]
  %v2617 = vld [vmem:[%s16 + $0x104] sm:$0xf]
  %v2618 = vld [vmem:[%s16 + $0x108] sm:$0xf]
  %v2619 = vld [vmem:[%s16 + $0x10c] sm:$0xf]
  %v2620 = vld [vmem:[%s16 + $0x110] sm:$0xf]
  %v2621 = vld [vmem:[%s16 + $0x114] sm:$0xf]
  %v2622 = vld [vmem:[%s16 + $0x118] sm:$0xf]
  %v2623 = vld [vmem:[%s16 + $0x11c] sm:$0xf]
  %v2624 = vld [vmem:[%s16 + $0x120] sm:$0xf]
  %v2625 = vld [vmem:[%s16 + $0x124] sm:$0xf]
  %v2626 = vld [vmem:[%s16 + $0x128] sm:$0xf]
  %v2627 = vld [vmem:[%s16 + $0x12c] sm:$0xf]
  %v2628 = vld [vmem:[%s16 + $0x130] sm:$0xf]
  %v2629 = vld [vmem:[%s16 + $0x134] sm:$0xf]
  %v2630 = vld [vmem:[%s16 + $0x138] sm:$0xf]
  %v2631 = vld [vmem:[%s16 + $0x13c] sm:$0xf]
  %v2632 = vld [vmem:[%s16 + $0x140] sm:$0xf]
  %v2633 = vld [vmem:[%s16 + $0x144] sm:$0xf]
  %v2634 = vld [vmem:[%s16 + $0x148] sm:$0xf]
  %v2635 = vld [vmem:[%s16 + $0x14c] sm:$0xf]
  %v2636 = vld [vmem:[%s16 + $0x150] sm:$0xf]
  %v2637 = vld [vmem:[%s16 + $0x154] sm:$0xf]
  %v2638 = vld [vmem:[%s16 + $0x158] sm:$0xf]
  %v2639 = vld [vmem:[%s16 + $0x15c] sm:$0xf]
  %v2640 = vld [vmem:[%s16 + $0x160] sm:$0xf]
  %v2641 = vld [vmem:[%s16 + $0x164] sm:$0xf]
  %v2642 = vld [vmem:[%s16 + $0x168] sm:$0xf]
  %v2643 = vld [vmem:[%s16 + $0x16c] sm:$0xf]
  %v2644 = vld [vmem:[%s16 + $0x170] sm:$0xf]
  %v2645 = vld [vmem:[%s16 + $0x174] sm:$0xf]
  %v2646 = vld [vmem:[%s16 + $0x178] sm:$0xf]
  %v2647 = vld [vmem:[%s16 + $0x17c] sm:$0xf]
  %v2648 = vld [vmem:[%s16 + $0x180] sm:$0xf]
  %v2649 = vld [vmem:[%s16 + $0x184] sm:$0xf]
  %v2650 = vld [vmem:[%s16 + $0x188] sm:$0xf]
  %v2651 = vld [vmem:[%s16 + $0x18c] sm:$0xf]
  %v2652 = vld [vmem:[%s16 + $0x190] sm:$0xf]
  %v2653 = vld [vmem:[%s16 + $0x194] sm:$0xf]
  %v2654 = vld [vmem:[%s16 + $0x198] sm:$0xf]
  %v2655 = vld [vmem:[%s16 + $0x19c] sm:$0xf]
  %v2656 = vld [vmem:[%s16 + $0x1a0] sm:$0xf]
  %v2657 = vld [vmem:[%s16 + $0x1a4] sm:$0xf]
  %v2658 = vld [vmem:[%s16 + $0x1a8] sm:$0xf]
  %v2659 = vld [vmem:[%s16 + $0x1ac] sm:$0xf]
  %v2660 = vld [vmem:[%s16 + $0x1b0] sm:$0xf]
  %v2661 = vld [vmem:[%s16 + $0x1b4] sm:$0xf]
  %v2662 = vld [vmem:[%s16 + $0x1b8] sm:$0xf]
  %v2663 = vld [vmem:[%s16 + $0x1bc] sm:$0xf]
  %v2664 = vld [vmem:[%s16 + $0x1c0] sm:$0xf]
  %v2665 = vld [vmem:[%s16 + $0x1c4] sm:$0xf]
  %v2666 = vld [vmem:[%s16 + $0x1c8] sm:$0xf]
  %v2667 = vld [vmem:[%s16 + $0x1cc] sm:$0xf]
  %v2668 = vld [vmem:[%s16 + $0x1d0] sm:$0xf]
  %v2669 = vld [vmem:[%s16 + $0x1d4] sm:$0xf]
  %v2670 = vld [vmem:[%s16 + $0x1d8] sm:$0xf]
  %v2671 = vld [vmem:[%s16 + $0x1dc] sm:$0xf]
  %v2672 = vld [vmem:[%s16 + $0x1e0] sm:$0xf]
  %v2673 = vld [vmem:[%s16 + $0x1e4] sm:$0xf]
  %v2674 = vld [vmem:[%s16 + $0x1e8] sm:$0xf]
  %v2675 = vld [vmem:[%s16 + $0x1ec] sm:$0xf]
  %v2676 = vld [vmem:[%s16 + $0x1f0] sm:$0xf]
  %v2677 = vld [vmem:[%s16 + $0x1f4] sm:$0xf]
  %v2678 = vld [vmem:[%s16 + $0x1f8] sm:$0xf]
  %v2679 = vld [vmem:[%s16 + $0x1fc] sm:$0xf]
  %v2680 = vld [vmem:[%s16 + $0x200] sm:$0xf]
  %v2681 = vld [vmem:[%s16 + $0x204] sm:$0xf]
  %v2682 = vld [vmem:[%s16 + $0x208] sm:$0xf]
  %v2683 = vld [vmem:[%s16 + $0x20c] sm:$0xf]
  %v2684 = vld [vmem:[%s16 + $0x210] sm:$0xf]
  %v2685 = vld [vmem:[%s16 + $0x214] sm:$0xf]
  %v2686 = vld [vmem:[%s16 + $0x218] sm:$0xf]
  %v2687 = vld [vmem:[%s16 + $0x21c] sm:$0xf]
  %v2688 = vld [vmem:[%s16 + $0x220] sm:$0xf]
  %v2689 = vld [vmem:[%s16 + $0x224] sm:$0xf]
  %v2690 = vld [vmem:[%s16 + $0x228] sm:$0xf]
  %v2691 = vld [vmem:[%s16 + $0x22c] sm:$0xf]
  %v2692 = vld [vmem:[%s16 + $0x230] sm:$0xf]
  %v2693 = vld [vmem:[%s16 + $0x234] sm:$0xf]
  %v2694 = vld [vmem:[%s16 + $0x238] sm:$0xf]
  %v2695 = vld [vmem:[%s16 + $0x23c] sm:$0xf]
  %v2696 = vld [vmem:[%s16 + $0x240] sm:$0xf]
  %v2697 = vld [vmem:[%s16 + $0x244] sm:$0xf]
  %v2698 = vld [vmem:[%s16 + $0x248] sm:$0xf]
  %v2699 = vld [vmem:[%s16 + $0x24c] sm:$0xf]
  %v2700 = vld [vmem:[%s16 + $0x250] sm:$0xf]
  %v2701 = vld [vmem:[%s16 + $0x254] sm:$0xf]
  %v2702 = vld [vmem:[%s16 + $0x258] sm:$0xf]
  %v2703 = vld [vmem:[%s16 + $0x25c] sm:$0xf]
  %v2704 = vld [vmem:[%s16 + $0x260] sm:$0xf]
  %v2705 = vld [vmem:[%s16 + $0x264] sm:$0xf]
  %v2706 = vld [vmem:[%s16 + $0x268] sm:$0xf]
  %v2707 = vld [vmem:[%s16 + $0x26c] sm:$0xf]
  %v2708 = vld [vmem:[%s16 + $0x270] sm:$0xf]
  %v2709 = vld [vmem:[%s16 + $0x274] sm:$0xf]
  %v2710 = vld [vmem:[%s16 + $0x278] sm:$0xf]
  %v2711 = vld [vmem:[%s16 + $0x27c] sm:$0xf]
  %v2712 = vld [vmem:[%s16 + $0x280] sm:$0xf]
  %v2713 = vld [vmem:[%s16 + $0x284] sm:$0xf]
  %v2714 = vld [vmem:[%s16 + $0x288] sm:$0xf]
  %v2715 = vld [vmem:[%s16 + $0x28c] sm:$0xf]
  %v2716 = vld [vmem:[%s16 + $0x290] sm:$0xf]
  %v2717 = vld [vmem:[%s16 + $0x294] sm:$0xf]
  %v2718 = vld [vmem:[%s16 + $0x298] sm:$0xf]
  %v2719 = vld [vmem:[%s16 + $0x29c] sm:$0xf]
  %v2720 = vld [vmem:[%s16 + $0x2a0] sm:$0xf]
  %v2721 = vld [vmem:[%s16 + $0x2a4] sm:$0xf]
  %v2722 = vld [vmem:[%s16 + $0x2a8] sm:$0xf]
  %v2723 = vld [vmem:[%s16 + $0x2ac] sm:$0xf]
  %v2724 = vld [vmem:[%s16 + $0x2b0] sm:$0xf]
  %v2725 = vld [vmem:[%s16 + $0x2b4] sm:$0xf]
  %v2726 = vld [vmem:[%s16 + $0x2b8] sm:$0xf]
  %v2727 = vld [vmem:[%s16 + $0x2bc] sm:$0xf]
  %v2728 = vld [vmem:[%s16 + $0x2c0] sm:$0xf]
  %v2729 = vld [vmem:[%s16 + $0x2c4] sm:$0xf]
  %v2730 = vld [vmem:[%s16 + $0x2c8] sm:$0xf]
  %v2731 = vld [vmem:[%s16 + $0x2cc] sm:$0xf]
  %v2732 = vld [vmem:[%s16 + $0x2d0] sm:$0xf]
  %v2733 = vld [vmem:[%s16 + $0x2d4] sm:$0xf]
  %v2734 = vld [vmem:[%s16 + $0x2d8] sm:$0xf]
  %v2735 = vld [vmem:[%s16 + $0x2dc] sm:$0xf]
  %v2736 = vld [vmem:[%s16 + $0x2e0] sm:$0xf]
  %v2737 = vld [vmem:[%s16 + $0x2e4] sm:$0xf]
  %v2738 = vld [vmem:[%s16 + $0x2e8] sm:$0xf]
  %v2739 = vld [vmem:[%s16 + $0x2ec] sm:$0xf]
  %v2740 = vld [vmem:[%s16 + $0x2f0] sm:$0xf]
  %v2741 = vld [vmem:[%s16 + $0x2f4] sm:$0xf]
  %v2742 = vld [vmem:[%s16 + $0x2f8] sm:$0xf]
  %v2743 = vld [vmem:[%s16 + $0x2fc] sm:$0xf]
  %v2744 = vld [vmem:[%s16 + $0x300] sm:$0xf]
  %v2745 = vld [vmem:[%s16 + $0x304] sm:$0xf]
  %v2746 = vld [vmem:[%s16 + $0x308] sm:$0xf]
  %v2747 = vld [vmem:[%s16 + $0x30c] sm:$0xf]
  %v2748 = vld [vmem:[%s16 + $0x310] sm:$0xf]
  %v2749 = vld [vmem:[%s16 + $0x314] sm:$0xf]
  %v2750 = vld [vmem:[%s16 + $0x318] sm:$0xf]
  %v2751 = vld [vmem:[%s16 + $0x31c] sm:$0xf]
  %v2752 = vld [vmem:[%s16 + $0x320] sm:$0xf]
  %v2753 = vld [vmem:[%s16 + $0x324] sm:$0xf]
  %v2754 = vld [vmem:[%s16 + $0x328] sm:$0xf]
  %v2755 = vld [vmem:[%s16 + $0x32c] sm:$0xf]
  %v2756 = vld [vmem:[%s16 + $0x330] sm:$0xf]
  %v2757 = vld [vmem:[%s16 + $0x334] sm:$0xf]
  %v2758 = vld [vmem:[%s16 + $0x338] sm:$0xf]
  %v2759 = vld [vmem:[%s16 + $0x33c] sm:$0xf]
  %v2760 = vld [vmem:[%s16 + $0x340] sm:$0xf]
  %v2761 = vld [vmem:[%s16 + $0x344] sm:$0xf]
  %v2762 = vld [vmem:[%s16 + $0x348] sm:$0xf]
  %v2763 = vld [vmem:[%s16 + $0x34c] sm:$0xf]
  %v2764 = vld [vmem:[%s16 + $0x350] sm:$0xf]
  %v2765 = vld [vmem:[%s16 + $0x354] sm:$0xf]
  %v2766 = vld [vmem:[%s16 + $0x358] sm:$0xf]
  %v2767 = vld [vmem:[%s16 + $0x35c] sm:$0xf]
  %v2768 = vld [vmem:[%s16 + $0x360] sm:$0xf]
  %v2769 = vld [vmem:[%s16 + $0x364] sm:$0xf]
  %v2770 = vld [vmem:[%s16 + $0x368] sm:$0xf]
  %v2771 = vld [vmem:[%s16 + $0x36c] sm:$0xf]
  %v2772 = vld [vmem:[%s16 + $0x370] sm:$0xf]
  %v2773 = vld [vmem:[%s16 + $0x374] sm:$0xf]
  %v2774 = vld [vmem:[%s16 + $0x378] sm:$0xf]
  %v2775 = vld [vmem:[%s16 + $0x37c] sm:$0xf]
  %v2776 = vld [vmem:[%s16 + $0x380] sm:$0xf]
  %v2777 = vld [vmem:[%s16 + $0x384] sm:$0xf]
  %v2778 = vld [vmem:[%s16 + $0x388] sm:$0xf]
  %v2779 = vld [vmem:[%s16 + $0x38c] sm:$0xf]
  %v2780 = vld [vmem:[%s16 + $0x390] sm:$0xf]
  %v2781 = vld [vmem:[%s16 + $0x394] sm:$0xf]
  %v2782 = vld [vmem:[%s16 + $0x398] sm:$0xf]
  %v2783 = vld [vmem:[%s16 + $0x39c] sm:$0xf]
  %v2784 = vld [vmem:[%s16 + $0x3a0] sm:$0xf]
  %v2785 = vld [vmem:[%s16 + $0x3a4] sm:$0xf]
  %v2786 = vld [vmem:[%s16 + $0x3a8] sm:$0xf]
  %v2787 = vld [vmem:[%s16 + $0x3ac] sm:$0xf]
  %v2788 = vld [vmem:[%s16 + $0x3b0] sm:$0xf]
  %v2789 = vld [vmem:[%s16 + $0x3b4] sm:$0xf]
  %v2790 = vld [vmem:[%s16 + $0x3b8] sm:$0xf]
  %v2791 = vld [vmem:[%s16 + $0x3bc] sm:$0xf]
  %v2792 = vld [vmem:[%s16 + $0x3c0] sm:$0xf]
  %v2793 = vld [vmem:[%s16 + $0x3c4] sm:$0xf]
  %v2794 = vld [vmem:[%s16 + $0x3c8] sm:$0xf]
  %v2795 = vld [vmem:[%s16 + $0x3cc] sm:$0xf]
  %v2796 = vld [vmem:[%s16 + $0x3d0] sm:$0xf]
  %v2797 = vld [vmem:[%s16 + $0x3d4] sm:$0xf]
  %v2798 = vld [vmem:[%s16 + $0x3d8] sm:$0xf]
  %v2799 = vld [vmem:[%s16 + $0x3dc] sm:$0xf]
  %v2800 = vld [vmem:[%s16 + $0x3e0] sm:$0xf]
  %v2801 = vld [vmem:[%s16 + $0x3e4] sm:$0xf]
  %v2802 = vld [vmem:[%s16 + $0x3e8] sm:$0xf]
  %v2803 = vld [vmem:[%s16 + $0x3ec] sm:$0xf]
  %v2804 = vld [vmem:[%s16 + $0x3f0] sm:$0xf]
  %v2805 = vld [vmem:[%s16 + $0x3f4] sm:$0xf]
  %v2806 = vld [vmem:[%s16 + $0x3f8] sm:$0xf]
  %v2807 = vld [vmem:[%s16 + $0x3fc] sm:$0xf]
  %v3064 = vunpack.c.l.b16 %v2552
  %v3065 = vunpack.c.l.b16 %v2553
  %v3066 = vunpack.c.l.b16 %v2554
  %v3067 = vunpack.c.l.b16 %v2555
  %v3068 = vunpack.c.l.b16 %v2556
  %v3069 = vunpack.c.l.b16 %v2557
  %v3070 = vunpack.c.l.b16 %v2558
  %v3071 = vunpack.c.l.b16 %v2559
  %v3072 = vunpack.c.l.b16 %v2560
  %v3073 = vunpack.c.l.b16 %v2561
  %v3074 = vunpack.c.l.b16 %v2562
  %v3075 = vunpack.c.l.b16 %v2563
  %v3076 = vunpack.c.l.b16 %v2564
  %v3077 = vunpack.c.l.b16 %v2565
  %v3078 = vunpack.c.l.b16 %v2566
  %v3079 = vunpack.c.l.b16 %v2567
  %v3080 = vunpack.c.l.b16 %v2568
  %v3081 = vunpack.c.l.b16 %v2569
  %v3082 = vunpack.c.l.b16 %v2570
  %v3083 = vunpack.c.l.b16 %v2571
  %v3084 = vunpack.c.l.b16 %v2572
  %v3085 = vunpack.c.l.b16 %v2573
  %v3086 = vunpack.c.l.b16 %v2574
  %v3087 = vunpack.c.l.b16 %v2575
  %v3088 = vunpack.c.l.b16 %v2576
  %v3089 = vunpack.c.l.b16 %v2577
  %v3090 = vunpack.c.l.b16 %v2578
  %v3091 = vunpack.c.l.b16 %v2579
  %v3092 = vunpack.c.l.b16 %v2580
  %v3093 = vunpack.c.l.b16 %v2581
  %v3094 = vunpack.c.l.b16 %v2582
  %v3095 = vunpack.c.l.b16 %v2583
  %v3096 = vunpack.c.l.b16 %v2584
  %v3097 = vunpack.c.l.b16 %v2585
  %v3098 = vunpack.c.l.b16 %v2586
  %v3099 = vunpack.c.l.b16 %v2587
  %v3100 = vunpack.c.l.b16 %v2588
  %v3101 = vunpack.c.l.b16 %v2589
  %v3102 = vunpack.c.l.b16 %v2590
  %v3103 = vunpack.c.l.b16 %v2591
  %v3104 = vunpack.c.l.b16 %v2592
  %v3105 = vunpack.c.l.b16 %v2593
  %v3106 = vunpack.c.l.b16 %v2594
  %v3107 = vunpack.c.l.b16 %v2595
  %v3108 = vunpack.c.l.b16 %v2596
  %v3109 = vunpack.c.l.b16 %v2597
  %v3110 = vunpack.c.l.b16 %v2598
  %v3111 = vunpack.c.l.b16 %v2599
  %v3112 = vunpack.c.l.b16 %v2600
  %v3113 = vunpack.c.l.b16 %v2601
  %v3114 = vunpack.c.l.b16 %v2602
  %v3115 = vunpack.c.l.b16 %v2603
  %v3116 = vunpack.c.l.b16 %v2604
  %v3117 = vunpack.c.l.b16 %v2605
  %v3118 = vunpack.c.l.b16 %v2606
  %v3119 = vunpack.c.l.b16 %v2607
  %v3120 = vunpack.c.l.b16 %v2608
  %v3121 = vunpack.c.l.b16 %v2609
  %v3122 = vunpack.c.l.b16 %v2610
  %v3123 = vunpack.c.l.b16 %v2611
  %v3124 = vunpack.c.l.b16 %v2612
  %v3125 = vunpack.c.l.b16 %v2613
  %v3126 = vunpack.c.l.b16 %v2614
  %v3127 = vunpack.c.l.b16 %v2615
  %v3128 = vunpack.c.l.b16 %v2616
  %v3129 = vunpack.c.l.b16 %v2617
  %v3130 = vunpack.c.l.b16 %v2618
  %v3131 = vunpack.c.l.b16 %v2619
  %v3132 = vunpack.c.l.b16 %v2620
  %v3133 = vunpack.c.l.b16 %v2621
  %v3134 = vunpack.c.l.b16 %v2622
  %v3135 = vunpack.c.l.b16 %v2623
  %v3136 = vunpack.c.l.b16 %v2624
  %v3137 = vunpack.c.l.b16 %v2625
  %v3138 = vunpack.c.l.b16 %v2626
  %v3139 = vunpack.c.l.b16 %v2627
  %v3140 = vunpack.c.l.b16 %v2628
  %v3141 = vunpack.c.l.b16 %v2629
  %v3142 = vunpack.c.l.b16 %v2630
  %v3143 = vunpack.c.l.b16 %v2631
  %v3144 = vunpack.c.l.b16 %v2632
  %v3145 = vunpack.c.l.b16 %v2633
  %v3146 = vunpack.c.l.b16 %v2634
  %v3147 = vunpack.c.l.b16 %v2635
  %v3148 = vunpack.c.l.b16 %v2636
  %v3149 = vunpack.c.l.b16 %v2637
  %v3150 = vunpack.c.l.b16 %v2638
  %v3151 = vunpack.c.l.b16 %v2639
  %v3152 = vunpack.c.l.b16 %v2640
  %v3153 = vunpack.c.l.b16 %v2641
  %v3154 = vunpack.c.l.b16 %v2642
  %v3155 = vunpack.c.l.b16 %v2643
  %v3156 = vunpack.c.l.b16 %v2644
  %v3157 = vunpack.c.l.b16 %v2645
  %v3158 = vunpack.c.l.b16 %v2646
  %v3159 = vunpack.c.l.b16 %v2647
  %v3160 = vunpack.c.l.b16 %v2648
  %v3161 = vunpack.c.l.b16 %v2649
  %v3162 = vunpack.c.l.b16 %v2650
  %v3163 = vunpack.c.l.b16 %v2651
  %v3164 = vunpack.c.l.b16 %v2652
  %v3165 = vunpack.c.l.b16 %v2653
  %v3166 = vunpack.c.l.b16 %v2654
  %v3167 = vunpack.c.l.b16 %v2655
  %v3168 = vunpack.c.l.b16 %v2656
  %v3169 = vunpack.c.l.b16 %v2657
  %v3170 = vunpack.c.l.b16 %v2658
  %v3171 = vunpack.c.l.b16 %v2659
  %v3172 = vunpack.c.l.b16 %v2660
  %v3173 = vunpack.c.l.b16 %v2661
  %v3174 = vunpack.c.l.b16 %v2662
  %v3175 = vunpack.c.l.b16 %v2663
  %v3176 = vunpack.c.l.b16 %v2664
  %v3177 = vunpack.c.l.b16 %v2665
  %v3178 = vunpack.c.l.b16 %v2666
  %v3179 = vunpack.c.l.b16 %v2667
  %v3180 = vunpack.c.l.b16 %v2668
  %v3181 = vunpack.c.l.b16 %v2669
  %v3182 = vunpack.c.l.b16 %v2670
  %v3183 = vunpack.c.l.b16 %v2671
  %v3184 = vunpack.c.l.b16 %v2672
  %v3185 = vunpack.c.l.b16 %v2673
  %v3186 = vunpack.c.l.b16 %v2674
  %v3187 = vunpack.c.l.b16 %v2675
  %v3188 = vunpack.c.l.b16 %v2676
  %v3189 = vunpack.c.l.b16 %v2677
  %v3190 = vunpack.c.l.b16 %v2678
  %v3191 = vunpack.c.l.b16 %v2679
  %v3192 = vunpack.c.l.b16 %v2680
  %v3193 = vunpack.c.l.b16 %v2681
  %v3194 = vunpack.c.l.b16 %v2682
  %v3195 = vunpack.c.l.b16 %v2683
  %v3196 = vunpack.c.l.b16 %v2684
  %v3197 = vunpack.c.l.b16 %v2685
  %v3198 = vunpack.c.l.b16 %v2686
  %v3199 = vunpack.c.l.b16 %v2687
  %v3200 = vunpack.c.l.b16 %v2688
  %v3201 = vunpack.c.l.b16 %v2689
  %v3202 = vunpack.c.l.b16 %v2690
  %v3203 = vunpack.c.l.b16 %v2691
  %v3204 = vunpack.c.l.b16 %v2692
  %v3205 = vunpack.c.l.b16 %v2693
  %v3206 = vunpack.c.l.b16 %v2694
  %v3207 = vunpack.c.l.b16 %v2695
  %v3208 = vunpack.c.l.b16 %v2696
  %v3209 = vunpack.c.l.b16 %v2697
  %v3210 = vunpack.c.l.b16 %v2698
  %v3211 = vunpack.c.l.b16 %v2699
  %v3212 = vunpack.c.l.b16 %v2700
  %v3213 = vunpack.c.l.b16 %v2701
  %v3214 = vunpack.c.l.b16 %v2702
  %v3215 = vunpack.c.l.b16 %v2703
  %v3216 = vunpack.c.l.b16 %v2704
  %v3217 = vunpack.c.l.b16 %v2705
  %v3218 = vunpack.c.l.b16 %v2706
  %v3219 = vunpack.c.l.b16 %v2707
  %v3220 = vunpack.c.l.b16 %v2708
  %v3221 = vunpack.c.l.b16 %v2709
  %v3222 = vunpack.c.l.b16 %v2710
  %v3223 = vunpack.c.l.b16 %v2711
  %v3224 = vunpack.c.l.b16 %v2712
  %v3225 = vunpack.c.l.b16 %v2713
  %v3226 = vunpack.c.l.b16 %v2714
  %v3227 = vunpack.c.l.b16 %v2715
  %v3228 = vunpack.c.l.b16 %v2716
  %v3229 = vunpack.c.l.b16 %v2717
  %v3230 = vunpack.c.l.b16 %v2718
  %v3231 = vunpack.c.l.b16 %v2719
  %v3232 = vunpack.c.l.b16 %v2720
  %v3233 = vunpack.c.l.b16 %v2721
  %v3234 = vunpack.c.l.b16 %v2722
  %v3235 = vunpack.c.l.b16 %v2723
  %v3236 = vunpack.c.l.b16 %v2724
  %v3237 = vunpack.c.l.b16 %v2725
  %v3238 = vunpack.c.l.b16 %v2726
  %v3239 = vunpack.c.l.b16 %v2727
  %v3240 = vunpack.c.l.b16 %v2728
  %v3241 = vunpack.c.l.b16 %v2729
  %v3242 = vunpack.c.l.b16 %v2730
  %v3243 = vunpack.c.l.b16 %v2731
  %v3244 = vunpack.c.l.b16 %v2732
  %v3245 = vunpack.c.l.b16 %v2733
  %v3246 = vunpack.c.l.b16 %v2734
  %v3247 = vunpack.c.l.b16 %v2735
  %v3248 = vunpack.c.l.b16 %v2736
  %v3249 = vunpack.c.l.b16 %v2737
  %v3250 = vunpack.c.l.b16 %v2738
  %v3251 = vunpack.c.l.b16 %v2739
  %v3252 = vunpack.c.l.b16 %v2740
  %v3253 = vunpack.c.l.b16 %v2741
  %v3254 = vunpack.c.l.b16 %v2742
  %v3255 = vunpack.c.l.b16 %v2743
  %v3256 = vunpack.c.l.b16 %v2744
  %v3257 = vunpack.c.l.b16 %v2745
  %v3258 = vunpack.c.l.b16 %v2746
  %v3259 = vunpack.c.l.b16 %v2747
  %v3260 = vunpack.c.l.b16 %v2748
  %v3261 = vunpack.c.l.b16 %v2749
  %v3262 = vunpack.c.l.b16 %v2750
  %v3263 = vunpack.c.l.b16 %v2751
  %v3264 = vunpack.c.l.b16 %v2752
  %v3265 = vunpack.c.l.b16 %v2753
  %v3266 = vunpack.c.l.b16 %v2754
  %v3267 = vunpack.c.l.b16 %v2755
  %v3268 = vunpack.c.l.b16 %v2756
  %v3269 = vunpack.c.l.b16 %v2757
  %v3270 = vunpack.c.l.b16 %v2758
  %v3271 = vunpack.c.l.b16 %v2759
  %v3272 = vunpack.c.l.b16 %v2760
  %v3273 = vunpack.c.l.b16 %v2761
  %v3274 = vunpack.c.l.b16 %v2762
  %v3275 = vunpack.c.l.b16 %v2763
  %v3276 = vunpack.c.l.b16 %v2764
  %v3277 = vunpack.c.l.b16 %v2765
  %v3278 = vunpack.c.l.b16 %v2766
  %v3279 = vunpack.c.l.b16 %v2767
  %v3280 = vunpack.c.l.b16 %v2768
  %v3281 = vunpack.c.l.b16 %v2769
  %v3282 = vunpack.c.l.b16 %v2770
  %v3283 = vunpack.c.l.b16 %v2771
  %v3284 = vunpack.c.l.b16 %v2772
  %v3285 = vunpack.c.l.b16 %v2773
  %v3286 = vunpack.c.l.b16 %v2774
  %v3287 = vunpack.c.l.b16 %v2775
  %v3288 = vunpack.c.l.b16 %v2776
  %v3289 = vunpack.c.l.b16 %v2777
  %v3290 = vunpack.c.l.b16 %v2778
  %v3291 = vunpack.c.l.b16 %v2779
  %v3292 = vunpack.c.l.b16 %v2780
  %v3293 = vunpack.c.l.b16 %v2781
  %v3294 = vunpack.c.l.b16 %v2782
  %v3295 = vunpack.c.l.b16 %v2783
  %v3296 = vunpack.c.l.b16 %v2784
  %v3297 = vunpack.c.l.b16 %v2785
  %v3298 = vunpack.c.l.b16 %v2786
  %v3299 = vunpack.c.l.b16 %v2787
  %v3300 = vunpack.c.l.b16 %v2788
  %v3301 = vunpack.c.l.b16 %v2789
  %v3302 = vunpack.c.l.b16 %v2790
  %v3303 = vunpack.c.l.b16 %v2791
  %v3304 = vunpack.c.l.b16 %v2792
  %v3305 = vunpack.c.l.b16 %v2793
  %v3306 = vunpack.c.l.b16 %v2794
  %v3307 = vunpack.c.l.b16 %v2795
  %v3308 = vunpack.c.l.b16 %v2796
  %v3309 = vunpack.c.l.b16 %v2797
  %v3310 = vunpack.c.l.b16 %v2798
  %v3311 = vunpack.c.l.b16 %v2799
  %v3312 = vunpack.c.l.b16 %v2800
  %v3313 = vunpack.c.l.b16 %v2801
  %v3314 = vunpack.c.l.b16 %v2802
  %v3315 = vunpack.c.l.b16 %v2803
  %v3316 = vunpack.c.l.b16 %v2804
  %v3317 = vunpack.c.l.b16 %v2805
  %v3318 = vunpack.c.l.b16 %v2806
  %v3319 = vunpack.c.l.b16 %v2807
  %v3320 = vpack.c.b16 %v3065, %v3064
  %v3321 = vpack.c.b16 %v3067, %v3066
  %v3322 = vpack.c.b16 %v3069, %v3068
  %v3323 = vpack.c.b16 %v3071, %v3070
  %v3324 = vpack.c.b16 %v3073, %v3072
  %v3325 = vpack.c.b16 %v3075, %v3074
  %v3326 = vpack.c.b16 %v3077, %v3076
  %v3327 = vpack.c.b16 %v3079, %v3078
  %v3328 = vpack.c.b16 %v3081, %v3080
  %v3329 = vpack.c.b16 %v3083, %v3082
  %v3330 = vpack.c.b16 %v3085, %v3084
  %v3331 = vpack.c.b16 %v3087, %v3086
  %v3332 = vpack.c.b16 %v3089, %v3088
  %v3333 = vpack.c.b16 %v3091, %v3090
  %v3334 = vpack.c.b16 %v3093, %v3092
  %v3335 = vpack.c.b16 %v3095, %v3094
  %v3336 = vpack.c.b16 %v3097, %v3096
  %v3337 = vpack.c.b16 %v3099, %v3098
  %v3338 = vpack.c.b16 %v3101, %v3100
  %v3339 = vpack.c.b16 %v3103, %v3102
  %v3340 = vpack.c.b16 %v3105, %v3104
  %v3341 = vpack.c.b16 %v3107, %v3106
  %v3342 = vpack.c.b16 %v3109, %v3108
  %v3343 = vpack.c.b16 %v3111, %v3110
  %v3344 = vpack.c.b16 %v3113, %v3112
  %v3345 = vpack.c.b16 %v3115, %v3114
  %v3346 = vpack.c.b16 %v3117, %v3116
  %v3347 = vpack.c.b16 %v3119, %v3118
  %v3348 = vpack.c.b16 %v3121, %v3120
  %v3349 = vpack.c.b16 %v3123, %v3122
  %v3350 = vpack.c.b16 %v3125, %v3124
  %v3351 = vpack.c.b16 %v3127, %v3126
  %v3352 = vpack.c.b16 %v3129, %v3128
  %v3353 = vpack.c.b16 %v3131, %v3130
  %v3354 = vpack.c.b16 %v3133, %v3132
  %v3355 = vpack.c.b16 %v3135, %v3134
  %v3356 = vpack.c.b16 %v3137, %v3136
  %v3357 = vpack.c.b16 %v3139, %v3138
  %v3358 = vpack.c.b16 %v3141, %v3140
  %v3359 = vpack.c.b16 %v3143, %v3142
  %v3360 = vpack.c.b16 %v3145, %v3144
  %v3361 = vpack.c.b16 %v3147, %v3146
  %v3362 = vpack.c.b16 %v3149, %v3148
  %v3363 = vpack.c.b16 %v3151, %v3150
  %v3364 = vpack.c.b16 %v3153, %v3152
  %v3365 = vpack.c.b16 %v3155, %v3154
  %v3366 = vpack.c.b16 %v3157, %v3156
  %v3367 = vpack.c.b16 %v3159, %v3158
  %v3368 = vpack.c.b16 %v3161, %v3160
  %v3369 = vpack.c.b16 %v3163, %v3162
  %v3370 = vpack.c.b16 %v3165, %v3164
  %v3371 = vpack.c.b16 %v3167, %v3166
  %v3372 = vpack.c.b16 %v3169, %v3168
  %v3373 = vpack.c.b16 %v3171, %v3170
  %v3374 = vpack.c.b16 %v3173, %v3172
  %v3375 = vpack.c.b16 %v3175, %v3174
  %v3376 = vpack.c.b16 %v3177, %v3176
  %v3377 = vpack.c.b16 %v3179, %v3178
  %v3378 = vpack.c.b16 %v3181, %v3180
  %v3379 = vpack.c.b16 %v3183, %v3182
  %v3380 = vpack.c.b16 %v3185, %v3184
  %v3381 = vpack.c.b16 %v3187, %v3186
  %v3382 = vpack.c.b16 %v3189, %v3188
  %v3383 = vpack.c.b16 %v3191, %v3190
  %v3384 = vpack.c.b16 %v3193, %v3192
  %v3385 = vpack.c.b16 %v3195, %v3194
  %v3386 = vpack.c.b16 %v3197, %v3196
  %v3387 = vpack.c.b16 %v3199, %v3198
  %v3388 = vpack.c.b16 %v3201, %v3200
  %v3389 = vpack.c.b16 %v3203, %v3202
  %v3390 = vpack.c.b16 %v3205, %v3204
  %v3391 = vpack.c.b16 %v3207, %v3206
  %v3392 = vpack.c.b16 %v3209, %v3208
  %v3393 = vpack.c.b16 %v3211, %v3210
  %v3394 = vpack.c.b16 %v3213, %v3212
  %v3395 = vpack.c.b16 %v3215, %v3214
  %v3396 = vpack.c.b16 %v3217, %v3216
  %v3397 = vpack.c.b16 %v3219, %v3218
  %v3398 = vpack.c.b16 %v3221, %v3220
  %v3399 = vpack.c.b16 %v3223, %v3222
  %v3400 = vpack.c.b16 %v3225, %v3224
  %v3401 = vpack.c.b16 %v3227, %v3226
  %v3402 = vpack.c.b16 %v3229, %v3228
  %v3403 = vpack.c.b16 %v3231, %v3230
  %v3404 = vpack.c.b16 %v3233, %v3232
  %v3405 = vpack.c.b16 %v3235, %v3234
  %v3406 = vpack.c.b16 %v3237, %v3236
  %v3407 = vpack.c.b16 %v3239, %v3238
  %v3408 = vpack.c.b16 %v3241, %v3240
  %v3409 = vpack.c.b16 %v3243, %v3242
  %v3410 = vpack.c.b16 %v3245, %v3244
  %v3411 = vpack.c.b16 %v3247, %v3246
  %v3412 = vpack.c.b16 %v3249, %v3248
  %v3413 = vpack.c.b16 %v3251, %v3250
  %v3414 = vpack.c.b16 %v3253, %v3252
  %v3415 = vpack.c.b16 %v3255, %v3254
  %v3416 = vpack.c.b16 %v3257, %v3256
  %v3417 = vpack.c.b16 %v3259, %v3258
  %v3418 = vpack.c.b16 %v3261, %v3260
  %v3419 = vpack.c.b16 %v3263, %v3262
  %v3420 = vpack.c.b16 %v3265, %v3264
  %v3421 = vpack.c.b16 %v3267, %v3266
  %v3422 = vpack.c.b16 %v3269, %v3268
  %v3423 = vpack.c.b16 %v3271, %v3270
  %v3424 = vpack.c.b16 %v3273, %v3272
  %v3425 = vpack.c.b16 %v3275, %v3274
  %v3426 = vpack.c.b16 %v3277, %v3276
  %v3427 = vpack.c.b16 %v3279, %v3278
  %v3428 = vpack.c.b16 %v3281, %v3280
  %v3429 = vpack.c.b16 %v3283, %v3282
  %v3430 = vpack.c.b16 %v3285, %v3284
  %v3431 = vpack.c.b16 %v3287, %v3286
  %v3432 = vpack.c.b16 %v3289, %v3288
  %v3433 = vpack.c.b16 %v3291, %v3290
  %v3434 = vpack.c.b16 %v3293, %v3292
  %v3435 = vpack.c.b16 %v3295, %v3294
  %v3436 = vpack.c.b16 %v3297, %v3296
  %v3437 = vpack.c.b16 %v3299, %v3298
  %v3438 = vpack.c.b16 %v3301, %v3300
  %v3439 = vpack.c.b16 %v3303, %v3302
  %v3440 = vpack.c.b16 %v3305, %v3304
  %v3441 = vpack.c.b16 %v3307, %v3306
  %v3442 = vpack.c.b16 %v3309, %v3308
  %v3443 = vpack.c.b16 %v3311, %v3310
  %v3444 = vpack.c.b16 %v3313, %v3312
  %v3445 = vpack.c.b16 %v3315, %v3314
  %v3446 = vpack.c.b16 %v3317, %v3316
  %v3447 = vpack.c.b16 %v3319, %v3318
  %3576 = vmatpush.bf16.msra.mxu0 %v3327
  %3577 = vmatpush.bf16.msra.mxu0 %v3326
  %3578 = vmatpush.bf16.msra.mxu0 %v3325
  %3579 = vmatpush.bf16.msra.mxu0 %v3324
  %3580 = vmatpush.bf16.msra.mxu0 %v3323
  %3581 = vmatpush.bf16.msra.mxu0 %v3322
  %3582 = vmatpush.bf16.msra.mxu0 %v3321
  %3583 = vmatpush.bf16.msra.mxu0 %v3320
  %3584 = vmatmul.bf16.gmra.mxu0 %v305
  %v3585 = vpop.f32.mrf.mxu0
  %v3586 = vadd.f32 0.0, %v3585
  %v3587 = vpop.f32.mrf.mxu0
  %3588 = vdwg.mxu0
  %3589 = vmatpush.bf16.msra.mxu0 %v3335
  %3590 = vmatpush.bf16.msra.mxu0 %v3334
  %3591 = vmatpush.bf16.msra.mxu0 %v3333
  %3592 = vmatpush.bf16.msra.mxu0 %v3332
  %3593 = vmatpush.bf16.msra.mxu0 %v3331
  %3594 = vmatpush.bf16.msra.mxu0 %v3330
  %3595 = vmatpush.bf16.msra.mxu0 %v3329
  %3596 = vmatpush.bf16.msra.mxu0 %v3328
  %3597 = vmatmul.bf16.gmra.mxu0 %v306
  %v3598 = vpop.f32.mrf.mxu0
  %v3599 = vadd.f32 %v3586, %v3598
  %v3600 = vpop.f32.mrf.mxu0
  %3601 = vdwg.mxu0
  %3602 = vmatpush.bf16.msra.mxu0 %v3343
  %3603 = vmatpush.bf16.msra.mxu0 %v3342
  %3604 = vmatpush.bf16.msra.mxu0 %v3341
  %3605 = vmatpush.bf16.msra.mxu0 %v3340
  %3606 = vmatpush.bf16.msra.mxu0 %v3339
  %3607 = vmatpush.bf16.msra.mxu0 %v3338
  %3608 = vmatpush.bf16.msra.mxu0 %v3337
  %3609 = vmatpush.bf16.msra.mxu0 %v3336
  %3610 = vmatmul.bf16.gmra.mxu0 %v307
  %v3611 = vpop.f32.mrf.mxu0
  %v3612 = vadd.f32 %v3599, %v3611
  %v3613 = vpop.f32.mrf.mxu0
  %3614 = vdwg.mxu0
  %3615 = vmatpush.bf16.msra.mxu0 %v3351
  %3616 = vmatpush.bf16.msra.mxu0 %v3350
  %3617 = vmatpush.bf16.msra.mxu0 %v3349
  %3618 = vmatpush.bf16.msra.mxu0 %v3348
  %3619 = vmatpush.bf16.msra.mxu0 %v3347
  %3620 = vmatpush.bf16.msra.mxu0 %v3346
  %3621 = vmatpush.bf16.msra.mxu0 %v3345
  %3622 = vmatpush.bf16.msra.mxu0 %v3344
  %3623 = vmatmul.bf16.gmra.mxu0 %v308
  %v3624 = vpop.f32.mrf.mxu0
  %v3625 = vadd.f32 %v3612, %v3624
  %v3626 = vpop.f32.mrf.mxu0
  %3627 = vdwg.mxu0
  %3628 = vmatpush.bf16.msra.mxu0 %v3359
  %3629 = vmatpush.bf16.msra.mxu0 %v3358
  %3630 = vmatpush.bf16.msra.mxu0 %v3357
  %3631 = vmatpush.bf16.msra.mxu0 %v3356
  %3632 = vmatpush.bf16.msra.mxu0 %v3355
  %3633 = vmatpush.bf16.msra.mxu0 %v3354
  %3634 = vmatpush.bf16.msra.mxu0 %v3353
  %3635 = vmatpush.bf16.msra.mxu0 %v3352
  %3636 = vmatmul.bf16.gmra.mxu0 %v309
  %v3637 = vpop.f32.mrf.mxu0
  %v3638 = vadd.f32 %v3625, %v3637
  %v3639 = vpop.f32.mrf.mxu0
  %3640 = vdwg.mxu0
  %3641 = vmatpush.bf16.msra.mxu0 %v3367
  %3642 = vmatpush.bf16.msra.mxu0 %v3366
  %3643 = vmatpush.bf16.msra.mxu0 %v3365
  %3644 = vmatpush.bf16.msra.mxu0 %v3364
  %3645 = vmatpush.bf16.msra.mxu0 %v3363
  %3646 = vmatpush.bf16.msra.mxu0 %v3362
  %3647 = vmatpush.bf16.msra.mxu0 %v3361
  %3648 = vmatpush.bf16.msra.mxu0 %v3360
  %3649 = vmatmul.bf16.gmra.mxu0 %v310
  %v3650 = vpop.f32.mrf.mxu0
  %v3651 = vadd.f32 %v3638, %v3650
  %v3652 = vpop.f32.mrf.mxu0
  %3653 = vdwg.mxu0
  %3654 = vmatpush.bf16.msra.mxu0 %v3375
  %3655 = vmatpush.bf16.msra.mxu0 %v3374
  %3656 = vmatpush.bf16.msra.mxu0 %v3373
  %3657 = vmatpush.bf16.msra.mxu0 %v3372
  %3658 = vmatpush.bf16.msra.mxu0 %v3371
  %3659 = vmatpush.bf16.msra.mxu0 %v3370
  %3660 = vmatpush.bf16.msra.mxu0 %v3369
  %3661 = vmatpush.bf16.msra.mxu0 %v3368
  %3662 = vmatmul.bf16.gmra.mxu0 %v311
  %v3663 = vpop.f32.mrf.mxu0
  %v3664 = vadd.f32 %v3651, %v3663
  %v3665 = vpop.f32.mrf.mxu0
  %3666 = vdwg.mxu0
  %3667 = vmatpush.bf16.msra.mxu0 %v3383
  %3668 = vmatpush.bf16.msra.mxu0 %v3382
  %3669 = vmatpush.bf16.msra.mxu0 %v3381
  %3670 = vmatpush.bf16.msra.mxu0 %v3380
  %3671 = vmatpush.bf16.msra.mxu0 %v3379
  %3672 = vmatpush.bf16.msra.mxu0 %v3378
  %3673 = vmatpush.bf16.msra.mxu0 %v3377
  %3674 = vmatpush.bf16.msra.mxu0 %v3376
  %3675 = vmatmul.bf16.gmra.mxu0 %v312
  %v3676 = vpop.f32.mrf.mxu0
  %v3677 = vadd.f32 %v3664, %v3676
  %v3678 = vpop.f32.mrf.mxu0
  %3679 = vdwg.mxu0
  %3680 = vmatpush.bf16.msra.mxu0 %v3391
  %3681 = vmatpush.bf16.msra.mxu0 %v3390
  %3682 = vmatpush.bf16.msra.mxu0 %v3389
  %3683 = vmatpush.bf16.msra.mxu0 %v3388
  %3684 = vmatpush.bf16.msra.mxu0 %v3387
  %3685 = vmatpush.bf16.msra.mxu0 %v3386
  %3686 = vmatpush.bf16.msra.mxu0 %v3385
  %3687 = vmatpush.bf16.msra.mxu0 %v3384
  %3688 = vmatmul.bf16.gmra.mxu0 %v313
  %v3689 = vpop.f32.mrf.mxu0
  %v3690 = vadd.f32 %v3677, %v3689
  %v3691 = vpop.f32.mrf.mxu0
  %3692 = vdwg.mxu0
  %3693 = vmatpush.bf16.msra.mxu0 %v3399
  %3694 = vmatpush.bf16.msra.mxu0 %v3398
  %3695 = vmatpush.bf16.msra.mxu0 %v3397
  %3696 = vmatpush.bf16.msra.mxu0 %v3396
  %3697 = vmatpush.bf16.msra.mxu0 %v3395
  %3698 = vmatpush.bf16.msra.mxu0 %v3394
  %3699 = vmatpush.bf16.msra.mxu0 %v3393
  %3700 = vmatpush.bf16.msra.mxu0 %v3392
  %3701 = vmatmul.bf16.gmra.mxu0 %v314
  %v3702 = vpop.f32.mrf.mxu0
  %v3703 = vadd.f32 %v3690, %v3702
  %v3704 = vpop.f32.mrf.mxu0
  %3705 = vdwg.mxu0
  %3706 = vmatpush.bf16.msra.mxu0 %v3407
  %3707 = vmatpush.bf16.msra.mxu0 %v3406
  %3708 = vmatpush.bf16.msra.mxu0 %v3405
  %3709 = vmatpush.bf16.msra.mxu0 %v3404
  %3710 = vmatpush.bf16.msra.mxu0 %v3403
  %3711 = vmatpush.bf16.msra.mxu0 %v3402
  %3712 = vmatpush.bf16.msra.mxu0 %v3401
  %3713 = vmatpush.bf16.msra.mxu0 %v3400
  %3714 = vmatmul.bf16.gmra.mxu0 %v315
  %v3715 = vpop.f32.mrf.mxu0
  %v3716 = vadd.f32 %v3703, %v3715
  %v3717 = vpop.f32.mrf.mxu0
  %3718 = vdwg.mxu0
  %3719 = vmatpush.bf16.msra.mxu0 %v3415
  %3720 = vmatpush.bf16.msra.mxu0 %v3414
  %3721 = vmatpush.bf16.msra.mxu0 %v3413
  %3722 = vmatpush.bf16.msra.mxu0 %v3412
  %3723 = vmatpush.bf16.msra.mxu0 %v3411
  %3724 = vmatpush.bf16.msra.mxu0 %v3410
  %3725 = vmatpush.bf16.msra.mxu0 %v3409
  %3726 = vmatpush.bf16.msra.mxu0 %v3408
  %3727 = vmatmul.bf16.gmra.mxu0 %v316
  %v3728 = vpop.f32.mrf.mxu0
  %v3729 = vadd.f32 %v3716, %v3728
  %v3730 = vpop.f32.mrf.mxu0
  %3731 = vdwg.mxu0
  %3732 = vmatpush.bf16.msra.mxu0 %v3423
  %3733 = vmatpush.bf16.msra.mxu0 %v3422
  %3734 = vmatpush.bf16.msra.mxu0 %v3421
  %3735 = vmatpush.bf16.msra.mxu0 %v3420
  %3736 = vmatpush.bf16.msra.mxu0 %v3419
  %3737 = vmatpush.bf16.msra.mxu0 %v3418
  %3738 = vmatpush.bf16.msra.mxu0 %v3417
  %3739 = vmatpush.bf16.msra.mxu0 %v3416
  %3740 = vmatmul.bf16.gmra.mxu0 %v317
  %v3741 = vpop.f32.mrf.mxu0
  %v3742 = vadd.f32 %v3729, %v3741
  %v3743 = vpop.f32.mrf.mxu0
  %3744 = vdwg.mxu0
  %3745 = vmatpush.bf16.msra.mxu0 %v3431
  %3746 = vmatpush.bf16.msra.mxu0 %v3430
  %3747 = vmatpush.bf16.msra.mxu0 %v3429
  %3748 = vmatpush.bf16.msra.mxu0 %v3428
  %3749 = vmatpush.bf16.msra.mxu0 %v3427
  %3750 = vmatpush.bf16.msra.mxu0 %v3426
  %3751 = vmatpush.bf16.msra.mxu0 %v3425
  %3752 = vmatpush.bf16.msra.mxu0 %v3424
  %3753 = vmatmul.bf16.gmra.mxu0 %v318
  %v3754 = vpop.f32.mrf.mxu0
  %v3755 = vadd.f32 %v3742, %v3754
  %v3756 = vpop.f32.mrf.mxu0
  %3757 = vdwg.mxu0
  %3758 = vmatpush.bf16.msra.mxu0 %v3439
  %3759 = vmatpush.bf16.msra.mxu0 %v3438
  %3760 = vmatpush.bf16.msra.mxu0 %v3437
  %3761 = vmatpush.bf16.msra.mxu0 %v3436
  %3762 = vmatpush.bf16.msra.mxu0 %v3435
  %3763 = vmatpush.bf16.msra.mxu0 %v3434
  %3764 = vmatpush.bf16.msra.mxu0 %v3433
  %3765 = vmatpush.bf16.msra.mxu0 %v3432
  %3766 = vmatmul.bf16.gmra.mxu0 %v319
  %v3767 = vpop.f32.mrf.mxu0
  %v3768 = vadd.f32 %v3755, %v3767
  %v3769 = vpop.f32.mrf.mxu0
  %3770 = vdwg.mxu0
  %3771 = vmatpush.bf16.msra.mxu0 %v3447
  %3772 = vmatpush.bf16.msra.mxu0 %v3446
  %3773 = vmatpush.bf16.msra.mxu0 %v3445
  %3774 = vmatpush.bf16.msra.mxu0 %v3444
  %3775 = vmatpush.bf16.msra.mxu0 %v3443
  %3776 = vmatpush.bf16.msra.mxu0 %v3442
  %3777 = vmatpush.bf16.msra.mxu0 %v3441
  %3778 = vmatpush.bf16.msra.mxu0 %v3440
  %3779 = vmatmul.bf16.gmra.mxu0 %v320
  %v3780 = vpop.f32.mrf.mxu0
  %v3781 = vadd.f32 %v3768, %v3780
  %v3782 = vpop.f32.mrf.mxu0
  %3783 = vdwg.mxu0
  %v3784 = vmax.f32 %v3781, 0.0
  %s3785 = scalar_lea.vmem %s3, 16
  %3786 = vst.msk [vmem:[%s3785] sm:$0xff] %vm1314, %v3784
  // Predicated region
  $region14: #{cam_forward.1} parent=0 // pred_check
    _
  $region15: #{cam_forward.1} parent=0 // pred_check_branch
    %3788 = sbr.rel (0) target = $region17
  $region16: #{cam_forward.1} parent=0 // pred_region
    _
  $region17: #{cam_forward.1} parent=0 // pred_fallthru
    _
  // Predicated region
  $region18: #{cam_forward.1} parent=0 // pred_check
    _
  $region19: #{cam_forward.1} parent=0 // pred_check_branch
    %3790 = sbr.rel (0) target = $region21
  $region20: #{cam_forward.1} parent=0 // pred_region
    _
  $region21: #{cam_forward.1} parent=0 // pred_fallthru
    _

// kernel: squeeze.5
$region0: #{squeeze.5}
  %s0 = inlined_call_operand.vmem [shape: f32[1,2,16], index: 0, kind: input, shape index: {}]
  %s1 = inlined_call_operand.vmem [shape: f32[2,4,4], index: 1, kind: output, shape index: {}]
  $region1: #{squeeze.5} parent=0
    #allocation0 [shape = 'u8[8192]{0}', space=vmem, size = 0x2000, scoped, tag = 'scoped mem for output reshape']
    #allocation1 [shape = 'u8[4096]{0}', space=vmem, size = 0x1000, scoped, tag = 'scoped mem for input reshape']
    %s3 = ssub.s32 4, 1
    %v4 = vld [vmem:[%s0] sm:%s3]
    %5 = vst [vmem:[#allocation1] sm:%s3] %v4
    %v6 = vld [vmem:[#allocation1] sm:$0x3]
    %vm7 = vcmask 31744
    %8 = vst.msk [vmem:[#allocation0] ss:$8 sm:$0x3] %vm7, %v6
    %v9 = vld [vmem:[#allocation1] sm:$0x3]
    %10 = vrot.lane.b32.xlu0 %v9, 124
    %v11 = vpop.permute.xlu0 %10
    %vm12 = vcmask 31744
    %s13 = scalar_lea.vmem [#allocation0], 1
    %14 = vst.msk [vmem:[%s13] ss:$8 sm:$0x3] %vm12, %v11
    %v15 = vld [vmem:[#allocation1] sm:$0x3]
    %16 = vrot.lane.b32.xlu0 %v15, 120
    %v17 = vpop.permute.xlu0 %16
    %vm18 = vcmask 31744
    %s19 = scalar_lea.vmem [#allocation0], 2
    %20 = vst.msk [vmem:[%s19] ss:$8 sm:$0x3] %vm18, %v17
    %v21 = vld [vmem:[#allocation1] sm:$0x3]
    %22 = vrot.lane.b32.xlu0 %v21, 116
    %v23 = vpop.permute.xlu0 %22
    %vm24 = vcmask 31744
    %s25 = scalar_lea.vmem [#allocation0], 3
    %26 = vst.msk [vmem:[%s25] ss:$8 sm:$0x3] %vm24, %v23
    %s28 = ssub.s32 16, 1
    %v29 = vld [vmem:[#allocation0] sm:%s28]
    %s31 = ssub.s32 16, 1
    %32 = vst [vmem:[%s1] sm:%s31] %v29
    %s33 = scalar_lea.vmem [#allocation0], 8
    %v34 = vld [vmem:[%s33] sm:%s28]
    %s36 = ssub.s32 16, 1
    %s37 = scalar_lea.vmem %s1, 4
    %38 = vst [vmem:[%s37] sm:%s36] %v34

</llo_original>
